<compile_context>
chip_gen: v7x
topology: tpu7x:2x2x1
jax: 0.10.0
libtpu: 0.0.40
codegen_flags: <defaults>
</compile_context>

<pallas_src>
import jax
import jax.numpy as jnp
from jax.experimental import pallas as pl
from jax.experimental.pallas import tpu as pltpu


def _round_up(n, m):
    return ((n + m - 1) // m) * m


def _erf_f32(x):
    """Abramowitz & Stegun 7.1.26 erf approximation (|err| <= 1.5e-7), f32."""
    p = 0.3275911
    a1, a2, a3, a4, a5 = (0.254829592, -0.284496736, 1.421413741,
                          -1.453152027, 1.061405429)
    ax = jnp.abs(x)
    t = 1.0 / (1.0 + p * ax)
    poly = ((((a5 * t + a4) * t + a3) * t + a2) * t + a1) * t
    y = 1.0 - poly * jnp.exp(-ax * ax)
    return jnp.where(x < 0, -y, y)


def _ffn_kernel(x_ref, w1_ref, b1_ref, w2_ref, b2_ref, o_ref):
    """One (bm, D) slab of tokens.

    x_ref  : (bm, D)   bf16 (or f32) activations
    w1_ref : (D, Dh)   bf16 first projection (in x out)
    b1_ref : (1, Dh)   f32 bias
    w2_ref : (Dh, D)   bf16 second projection (in x out)
    b2_ref : (1, D)    f32 bias
    o_ref  : (bm, D)   bf16 (or f32) output
    """
    x = x_ref[...].astype(jnp.bfloat16)                                # no-op if already bf16
    h = jnp.dot(x, w1_ref[...], preferred_element_type=jnp.float32)    # (bm, Dh) f32 acc
    h = h + b1_ref[...]

    # Exact (erf-based) GELU, all in f32 — matches torch.nn.GELU() default.
    inv_sqrt2 = 0.7071067811865476
    h = 0.5 * h * (1.0 + _erf_f32(h * inv_sqrt2))

    o = jnp.dot(h.astype(jnp.bfloat16), w2_ref[...],
                preferred_element_type=jnp.float32)                    # (bm, D) f32 acc
    o = o + b2_ref[...]
    o_ref[...] = o.astype(o_ref.dtype)


def _vmem_needed_bytes(bm, D, Dh, x_bytes, out_bytes):
    """Estimate peak VMEM use for one pipelined grid step."""
    act_in = 2 * bm * D * x_bytes            # double-buffered input slab
    act_out = 2 * bm * D * out_bytes         # double-buffered output slab
    weights = 2 * 2 * D * Dh * 2             # w1 + w2, bf16, default double-buffered
    biases = 2 * 2 * (Dh + D) * 4            # f32 biases, double-buffered
    interm = 2 * bm * Dh * 4                 # (bm, Dh) f32 intermediate (+slack)
    return act_in + act_out + weights + biases + interm


def _physical_vmem_bytes():
    try:
        return int(pltpu.get_tpu_info().vmem_capacity_bytes)
    except Exception:
        return 64 * 1024 * 1024              # conservative (v7x per-TC size)


def feed_forward_pallas(x2d, w1_bf16, b1, w2_bf16, b2, *, block_m=1024,
                        out_dtype=jnp.bfloat16):
    """x2d: (M, D) bf16/f32; weights pre-transposed (in, out) bf16; biases (1, out) f32."""
    M, D = x2d.shape
    Dh = w1_bf16.shape[1]

    # Row tile: big enough to amortize per-step pipeline overhead, but clamped
    # to ~ceil(M/2) (multiple of 8) so the grid has >= 2 steps for v7x megacore.
    target = max(8, _round_up((M + 1) // 2, 8))
    bm = min(block_m, target)
    if bm >= M:
        bm = M                                # one full-extent block (always legal)

    x_bytes = jnp.dtype(x2d.dtype).itemsize
    o_bytes = jnp.dtype(out_dtype).itemsize
    vmem_cap = int(_physical_vmem_bytes() * 0.85)

    needed = _vmem_needed_bytes(bm, D, Dh, x_bytes, o_bytes)
    while needed > vmem_cap and bm > 256:     # safety valve for huge dims/tiles
        bm = max(256, _round_up(bm // 2, 8))
        needed = _vmem_needed_bytes(bm, D, Dh, x_bytes, o_bytes)

    vmem_limit = min(max(int(needed * 1.25) + (4 << 20), 16 << 20), vmem_cap)

    grid = (pl.cdiv(M, bm),)                  # partial last block handled by Pallas

    out = pl.pallas_call(
        _ffn_kernel,
        out_shape=jax.ShapeDtypeStruct((M, D), out_dtype),
        grid_spec=pltpu.PrefetchScalarGridSpec(
            num_scalar_prefetch=0,
            grid=grid,
            in_specs=[
                pl.BlockSpec((bm, D), lambda i: (i, 0)),     # activations slab
                pl.BlockSpec((D, Dh), lambda i: (0, 0)),     # w1 (grid-invariant)
                pl.BlockSpec((1, Dh), lambda i: (0, 0)),     # b1
                pl.BlockSpec((Dh, D), lambda i: (0, 0)),     # w2 (grid-invariant)
                pl.BlockSpec((1, D), lambda i: (0, 0)),      # b2
            ],
            out_specs=pl.BlockSpec((bm, D), lambda i: (i, 0)),
        ),
        compiler_params=pltpu.CompilerParams(
            dimension_semantics=("parallel",),               # megacore sharding
            vmem_limit_bytes=vmem_limit,
        ),
    )(x2d, w1_bf16, b1, w2_bf16, b2)
    return out


class FeedForwardPallas:
    """JAX/Pallas port of the PyTorch `FeedForward` module (dropout=0 / eval mode)."""

    def __init__(self, dim, mult=2, dropout=0.0, key=None):
        del dropout  # TODO(synk): training-mode dropout not implemented (identity in eval).
        inner_dim = int(dim * mult)
        self.dim = dim
        self.inner_dim = inner_dim

        key = jax.random.PRNGKey(42) if key is None else key
        k1, k2, k3, k4 = jax.random.split(key, 4)
        # nn.Linear default init: U(-1/sqrt(fan_in), 1/sqrt(fan_in)).
        # Weights stored pre-transposed (in, out) so the kernel computes x @ W.
        lim1 = 1.0 / (dim ** 0.5)
        lim2 = 1.0 / (inner_dim ** 0.5)
        self.w1 = jax.random.uniform(k1, (dim, inner_dim), jnp.float32, -lim1, lim1)
        self.b1 = jax.random.uniform(k2, (1, inner_dim), jnp.float32, -lim1, lim1)
        self.w2 = jax.random.uniform(k3, (inner_dim, dim), jnp.float32, -lim2, lim2)
        self.b2 = jax.random.uniform(k4, (1, dim), jnp.float32, -lim2, lim2)

        # bf16 copies feed the MXU; accumulation stays in f32 inside the kernel.
        self.w1_bf16 = self.w1.astype(jnp.bfloat16)
        self.w2_bf16 = self.w2.astype(jnp.bfloat16)

    def __call__(self, x):
        assert x.shape[-1] == self.dim
        lead = x.shape[:-1]
        x2d = x.reshape(-1, self.dim)
        out = feed_forward_pallas(x2d, self.w1_bf16, self.b1, self.w2_bf16, self.b2)
        return out.reshape(*lead, self.dim)


def _reference(x2d_f32, w1, b1, w2, b2):
    """Pure-JAX f32 reference matching the PyTorch forward (dropout=0)."""
    h = x2d_f32 @ w1 + b1
    h = jax.nn.gelu(h, approximate=False)     # torch.nn.GELU() default = exact erf
    return h @ w2 + b2


if __name__ == "__main__":
    dim, mult = 128, 2
    b, hgt, wid = 2, 16, 16                   # M = 2*16*16 = 512 tokens

    mod = FeedForwardPallas(dim, mult=mult, key=jax.random.PRNGKey(42))

    # bf16 activations in / bf16 out: halves HBM traffic for this bandwidth-bound
    # FFN. f32 inputs also work (the kernel casts in VMEM).
    x = jax.random.normal(jax.random.PRNGKey(0), (b, hgt, wid, dim),
                          jnp.float32).astype(jnp.bfloat16)

    out = jax.block_until_ready(mod(x))

    ref = _reference(x.reshape(-1, dim).astype(jnp.float32),
                     mod.w1, mod.b1, mod.w2, mod.b2).reshape(x.shape)

    assert out.shape == x.shape
    assert out.dtype == jnp.bfloat16
    max_err = float(jnp.max(jnp.abs(out.astype(jnp.float32) - ref)))
    # Tolerance accounts for bf16 activations/weights/output (f32 accumulation
    # keeps the error at the ~1e-2 level).
    assert jnp.allclose(out.astype(jnp.float32), ref, atol=3e-2, rtol=3e-2), (
        f"mismatch vs reference (max abs err {max_err})")

    print("KERNEL_OK")
</pallas_src>

<mosaic_0001>
module attributes {stable_mosaic.version = 11 : i64} {
  func.func @_ffn_kernel(%arg0: i32, %arg1: memref<256x128xbf16, #tpu.memory_space<vmem>>, %arg2: memref<128x256xbf16, #tpu.memory_space<vmem>>, %arg3: memref<1x256xf32, #tpu.memory_space<vmem>>, %arg4: memref<256x128xbf16, #tpu.memory_space<vmem>>, %arg5: memref<1x128xf32, #tpu.memory_space<vmem>>, %arg6: memref<256x128xbf16, #tpu.memory_space<vmem>>) attributes {dimension_semantics = [#tpu.dimension_semantics<parallel>], iteration_bounds = array<i64: 2>, scalar_prefetch = 0 : i64, scratch_operands = 0 : i64, tpu.core_type = #tpu.core_type<tc>, window_params = [{transform_indices = @transform_0, window_bounds = array<i64: 256, 128>}, {pipeline_mode = #tpu.pipeline_mode<synchronous>, transform_indices = @transform_1, window_bounds = array<i64: 128, 256>}, {pipeline_mode = #tpu.pipeline_mode<synchronous>, transform_indices = @transform_2, window_bounds = array<i64: 1, 256>}, {pipeline_mode = #tpu.pipeline_mode<synchronous>, transform_indices = @transform_3, window_bounds = array<i64: 256, 128>}, {pipeline_mode = #tpu.pipeline_mode<synchronous>, transform_indices = @transform_4, window_bounds = array<i64: 1, 128>}, {transform_indices = @transform_5, window_bounds = array<i64: 256, 128>}]} {
    %c0 = arith.constant 0 : index
    %c0_0 = arith.constant 0 : index
    %0 = vector.load %arg1[%c0, %c0_0] : memref<256x128xbf16, #tpu.memory_space<vmem>>, vector<256x128xbf16>
    %c0_1 = arith.constant 0 : index
    %c0_2 = arith.constant 0 : index
    %1 = vector.load %arg2[%c0_1, %c0_2] : memref<128x256xbf16, #tpu.memory_space<vmem>>, vector<128x256xbf16>
    %cst = arith.constant dense<0.000000e+00> : vector<256x256xf32>
    %2 = tpu.matmul %0, %1, %cst {dimension_numbers = #tpu.dot_dimension_numbers<[1], [0], [0], [1], [0, 0, 1, 1], [], []>} : vector<256x128xbf16>, vector<128x256xbf16>, vector<256x256xf32> -> vector<256x256xf32>
    %c0_3 = arith.constant 0 : index
    %c0_4 = arith.constant 0 : index
    %3 = vector.load %arg3[%c0_3, %c0_4] : memref<1x256xf32, #tpu.memory_space<vmem>>, vector<1x256xf32>
    %4 = vector.broadcast %3 : vector<1x256xf32> to vector<256x256xf32>
    %5 = arith.addf %2, %4 : vector<256x256xf32>
    %cst_5 = arith.constant 5.000000e-01 : f32
    %6 = vector.broadcast %cst_5 : f32 to vector<256x256xf32>
    %7 = arith.mulf %6, %5 : vector<256x256xf32>
    %cst_6 = arith.constant 0.707106769 : f32
    %8 = vector.broadcast %cst_6 : f32 to vector<256x256xf32>
    %9 = arith.mulf %5, %8 : vector<256x256xf32>
    %10 = math.absf %9 : vector<256x256xf32>
    %cst_7 = arith.constant 0.327591091 : f32
    %11 = vector.broadcast %cst_7 : f32 to vector<256x256xf32>
    %12 = arith.mulf %11, %10 : vector<256x256xf32>
    %cst_8 = arith.constant 1.000000e+00 : f32
    %13 = vector.broadcast %cst_8 : f32 to vector<256x256xf32>
    %14 = arith.addf %13, %12 : vector<256x256xf32>
    %cst_9 = arith.constant 1.000000e+00 : f32
    %15 = vector.broadcast %cst_9 : f32 to vector<256x256xf32>
    %16 = arith.divf %15, %14 : vector<256x256xf32>
    %cst_10 = arith.constant 1.06140542 : f32
    %17 = vector.broadcast %cst_10 : f32 to vector<256x256xf32>
    %18 = arith.mulf %17, %16 : vector<256x256xf32>
    %cst_11 = arith.constant -1.45315206 : f32
    %19 = vector.broadcast %cst_11 : f32 to vector<256x256xf32>
    %20 = arith.addf %18, %19 : vector<256x256xf32>
    %21 = arith.mulf %20, %16 : vector<256x256xf32>
    %cst_12 = arith.constant 1.42141378 : f32
    %22 = vector.broadcast %cst_12 : f32 to vector<256x256xf32>
    %23 = arith.addf %21, %22 : vector<256x256xf32>
    %24 = arith.mulf %23, %16 : vector<256x256xf32>
    %cst_13 = arith.constant -0.284496725 : f32
    %25 = vector.broadcast %cst_13 : f32 to vector<256x256xf32>
    %26 = arith.addf %24, %25 : vector<256x256xf32>
    %27 = arith.mulf %26, %16 : vector<256x256xf32>
    %cst_14 = arith.constant 0.254829586 : f32
    %28 = vector.broadcast %cst_14 : f32 to vector<256x256xf32>
    %29 = arith.addf %27, %28 : vector<256x256xf32>
    %30 = arith.mulf %29, %16 : vector<256x256xf32>
    %cst_15 = arith.constant 0.000000e+00 : f32
    %31 = vector.broadcast %cst_15 : f32 to vector<256x256xf32>
    %32 = arith.subf %31, %10 : vector<256x256xf32>
    %33 = arith.mulf %32, %10 : vector<256x256xf32>
    %34 = math.exp %33 : vector<256x256xf32>
    %35 = arith.mulf %30, %34 : vector<256x256xf32>
    %cst_16 = arith.constant 1.000000e+00 : f32
    %36 = vector.broadcast %cst_16 : f32 to vector<256x256xf32>
    %37 = arith.subf %36, %35 : vector<256x256xf32>
    %cst_17 = arith.constant 0.000000e+00 : f32
    %38 = vector.broadcast %cst_17 : f32 to vector<256x256xf32>
    %39 = arith.cmpf olt, %9, %38 : vector<256x256xf32>
    %cst_18 = arith.constant 0.000000e+00 : f32
    %40 = vector.broadcast %cst_18 : f32 to vector<256x256xf32>
    %41 = arith.subf %40, %37 : vector<256x256xf32>
    %42 = arith.select %39, %41, %37 : vector<256x256xi1>, vector<256x256xf32>
    %cst_19 = arith.constant 1.000000e+00 : f32
    %43 = vector.broadcast %cst_19 : f32 to vector<256x256xf32>
    %44 = arith.addf %43, %42 : vector<256x256xf32>
    %45 = arith.mulf %7, %44 : vector<256x256xf32>
    %46 = arith.truncf %45 : vector<256x256xf32> to vector<256x256xbf16>
    %c0_20 = arith.constant 0 : index
    %c0_21 = arith.constant 0 : index
    %47 = vector.load %arg4[%c0_20, %c0_21] : memref<256x128xbf16, #tpu.memory_space<vmem>>, vector<256x128xbf16>
    %cst_22 = arith.constant dense<0.000000e+00> : vector<256x128xf32>
    %48 = tpu.matmul %46, %47, %cst_22 {dimension_numbers = #tpu.dot_dimension_numbers<[1], [0], [0], [1], [0, 0, 1, 1], [], []>} : vector<256x256xbf16>, vector<256x128xbf16>, vector<256x128xf32> -> vector<256x128xf32>
    %c0_23 = arith.constant 0 : index
    %c0_24 = arith.constant 0 : index
    %49 = vector.load %arg5[%c0_23, %c0_24] : memref<1x128xf32, #tpu.memory_space<vmem>>, vector<1x128xf32>
    %50 = vector.broadcast %49 : vector<1x128xf32> to vector<256x128xf32>
    %51 = arith.addf %48, %50 : vector<256x128xf32>
    %52 = arith.truncf %51 : vector<256x128xf32> to vector<256x128xbf16>
    %c0_25 = arith.constant 0 : index
    %c0_26 = arith.constant 0 : index
    %53 = vector.load %arg6[%c0_25, %c0_26] : memref<256x128xbf16, #tpu.memory_space<vmem>>, vector<256x128xbf16>
    tpu.vector_store %arg6[%c0_25, %c0_26], %52 {strides = array<i32>} : memref<256x128xbf16, #tpu.memory_space<vmem>>, vector<256x128xbf16>,
    return
  }
  func.func @transform_0(%arg0: i32) -> (i32, i32) {
    %c0_i32 = arith.constant 0 : i32
    %c0_i32_0 = arith.constant 0 : i32
    return %arg0, %c0_i32 : i32, i32
  }
  func.func @transform_1(%arg0: i32) -> (i32, i32) {
    %c0_i32 = arith.constant 0 : i32
    %c0_i32_0 = arith.constant 0 : i32
    %c0_i32_1 = arith.constant 0 : i32
    return %c0_i32, %c0_i32_0 : i32, i32
  }
  func.func @transform_2(%arg0: i32) -> (i32, i32) {
    %c0_i32 = arith.constant 0 : i32
    %c0_i32_0 = arith.constant 0 : i32
    %c0_i32_1 = arith.constant 0 : i32
    return %c0_i32, %c0_i32_0 : i32, i32
  }
  func.func @transform_3(%arg0: i32) -> (i32, i32) {
    %c0_i32 = arith.constant 0 : i32
    %c0_i32_0 = arith.constant 0 : i32
    %c0_i32_1 = arith.constant 0 : i32
    return %c0_i32, %c0_i32_0 : i32, i32
  }
  func.func @transform_4(%arg0: i32) -> (i32, i32) {
    %c0_i32 = arith.constant 0 : i32
    %c0_i32_0 = arith.constant 0 : i32
    %c0_i32_1 = arith.constant 0 : i32
    return %c0_i32, %c0_i32_0 : i32, i32
  }
  func.func @transform_5(%arg0: i32) -> (i32, i32) {
    %c0_i32 = arith.constant 0 : i32
    %c0_i32_0 = arith.constant 0 : i32
    return %arg0, %c0_i32 : i32, i32
  }
}

</mosaic_0001>

<llo_original>
// kernel: tpu_custom_call.1
$region0: #{tpu_custom_call.1}
  #allocation0 [shape = 'u32[]', space=smem, size = 0x4, offset = 0x4, fixed_abs, tag = 'smem constant byte address 0x4 - core index']
  #allocation1 [shape = 'u32[144,128]{1,0:T(1,128)}', space=vmem, size = 0x12000, scoped, tag = 'internal scratch']
  %s0 = inlined_call_operand.hbm [shape: bf16[512,128], index: 0, kind: input, shape index: {}]
  %s1 = inlined_call_operand.hbm [shape: bf16[128,256], index: 1, kind: input, shape index: {}]
  %s2 = inlined_call_operand.vmem [shape: f32[1,256], index: 2, kind: input, shape index: {}]
  %s3 = inlined_call_operand.hbm [shape: bf16[256,128], index: 3, kind: input, shape index: {}]
  %s4 = inlined_call_operand.vmem [shape: f32[1,128], index: 4, kind: input, shape index: {}]
  %s5 = inlined_call_operand.hbm [shape: bf16[512,128], index: 5, kind: output, shape index: {}]
  %s6 = sld [smem:[#allocation0]]
  $region65: #{tpu_custom_call.1} parent=0
    _
  %s8 = ssub.s32 1, %s6
  %s9 = scalar_select 0, %s8, %s6
  $region1: #{tpu_custom_call.1} parent=0
    #allocation2 [shape = 'u8[131072]{0}', space=vmem, size = 0x20000, scoped, tag = 'input window, operand 0']
    #allocation3 [shape = 's32[2]{0}', space=sflag, size = 0x8, scoped, tag = 'scoped memory for tpu_custom_call.1']
    #allocation4 [shape = 's32[2]{0}', space=sflag, size = 0x8, scoped, tag = 'scoped memory for tpu_custom_call.1']
    #allocation5 [shape = 'u8[65536]{0}', space=vmem, size = 0x10000, scoped, tag = 'input window, operand 1, single buffered']
    #allocation6 [shape = 's32[1]{0}', space=sflag, size = 0x4, scoped, tag = 'scoped memory for tpu_custom_call.1']
    #allocation7 [shape = 'u8[65536]{0}', space=vmem, size = 0x10000, scoped, tag = 'input window, operand 3, single buffered']
    #allocation8 [shape = 'u8[131072]{0}', space=vmem, size = 0x20000, scoped, tag = 'output window, operand 0']
    %10 = vsyncpa [#allocation3], 0
    %s11 = scalar_lea.sflag [#allocation3], 1
    %12 = vsyncpa %s11, 0
    %13 = vsyncpa [#allocation6], 0
    %14 = vsyncpa [#allocation4], 0
    %s15 = scalar_lea.sflag [#allocation4], 1
    %16 = vsyncpa %s15, 0
    loop: start=0, step=1, limit=4
    $region2: #{tpu_custom_call.1} parent=1 // loop_pre_header
      _
    $region3: #{tpu_custom_call.1} parent=1 // loop_header
      %s18 = sphi 0, %s22
      %p19 = scmp.ge.s32.totalorder %s18, 4
      %s28 = sphi 0, %s30
      %s31 = sphi 0, %s28
      %s32 = sphi 0, %s31
      %s48 = sphi 0, %s32
      %s52 = sphi 0, %s52
      %s54 = sphi 0, %s52
      %s55 = sphi 0, %s54
      %s69 = sphi 0, %s55
      %s73 = sphi 0, %s73
      %s75 = sphi 0, %s73
      %s76 = sphi 0, %s75
      %s90 = sphi 0, %s76
      %s94 = sphi 0, %s94
      %s96 = sphi 0, %s94
      %s97 = sphi 0, %s96
      %s111 = sphi 0, %s97
      %s115 = sphi 0, %s115
      %s117 = sphi 0, %s115
      %s118 = sphi 0, %s117
      %s132 = sphi 0, %s118
      %s138 = sphi 0, %s140
      %s141 = sphi 0, %s138
      %s142 = sphi 0, %s141
      %s158 = sphi 0, %s142
    $region4: #{tpu_custom_call.1} parent=1 // loop_header_branch
      %21 = sbr.rel (%p19) target = $region8
    $region5: #{tpu_custom_call.1} parent=1 // loop_body
      %s23 = ssub.s32 %s18, 1
      %s24 = ssub.s32 %s18, 2
      %s25 = sadd.s32 %s18, 1
      %s26 = ssub.s32 %s18, %s25
      %p27 = scmp.eq.s32.totalorder %s26, 0
      %s29 = sadd.s32 %s28, 1
      %s30 = scalar_select %p27, %s28, %s29
      %p33 = pneg %p27
      %p34 = scmp.eq.s32.totalorder %s18, 1
      %p35 = por %p33, %p34
      %p36 = scmp.ne.s32.totalorder %s28, %s31
      %p37 = scmp.eq.s32.totalorder %s18, 0
      %p38 = por %p36, %p37
      %p39 = scmp.ne.s32.totalorder %s28, %s31
      %p40 = scmp.eq.s32.totalorder %s23, 1
      %p41 = por %p39, %p40
      %p42 = scmp.ne.s32.totalorder %s31, %s32
      %p43 = scmp.eq.s32.totalorder %s23, 0
      %p44 = por %p42, %p43
      %p45 = scmp.ne.s32.totalorder %s31, %s32
      %p46 = scmp.eq.s32.totalorder %s24, 1
      %p47 = por %p45, %p46
      %p49 = scmp.ne.s32.totalorder %s32, %s48
      %p50 = scmp.eq.s32.totalorder %s24, 0
      %p51 = por %p49, %p50
      %s53 = sadd.s32 %s52, 1
      %p56 = scmp.eq.s32.totalorder %s18, 1
      %p57 = scmp.ne.s32.totalorder %s52, %s54
      %p58 = scmp.eq.s32.totalorder %s18, 0
      %p59 = por %p57, %p58
      %p60 = scmp.ne.s32.totalorder %s52, %s54
      %p61 = scmp.eq.s32.totalorder %s23, 1
      %p62 = por %p60, %p61
      %p63 = scmp.ne.s32.totalorder %s54, %s55
      %p64 = scmp.eq.s32.totalorder %s23, 0
      %p65 = por %p63, %p64
      %p66 = scmp.ne.s32.totalorder %s54, %s55
      %p67 = scmp.eq.s32.totalorder %s24, 1
      %p68 = por %p66, %p67
      %p70 = scmp.ne.s32.totalorder %s55, %s69
      %p71 = scmp.eq.s32.totalorder %s24, 0
      %p72 = por %p70, %p71
      %s74 = sadd.s32 %s73, 1
      %p77 = scmp.eq.s32.totalorder %s18, 1
      %p78 = scmp.ne.s32.totalorder %s73, %s75
      %p79 = scmp.eq.s32.totalorder %s18, 0
      %p80 = por %p78, %p79
      %p81 = scmp.ne.s32.totalorder %s73, %s75
      %p82 = scmp.eq.s32.totalorder %s23, 1
      %p83 = por %p81, %p82
      %p84 = scmp.ne.s32.totalorder %s75, %s76
      %p85 = scmp.eq.s32.totalorder %s23, 0
      %p86 = por %p84, %p85
      %p87 = scmp.ne.s32.totalorder %s75, %s76
      %p88 = scmp.eq.s32.totalorder %s24, 1
      %p89 = por %p87, %p88
      %p91 = scmp.ne.s32.totalorder %s76, %s90
      %p92 = scmp.eq.s32.totalorder %s24, 0
      %p93 = por %p91, %p92
      %s95 = sadd.s32 %s94, 1
      %p98 = scmp.eq.s32.totalorder %s18, 1
      %p99 = scmp.ne.s32.totalorder %s94, %s96
      %p100 = scmp.eq.s32.totalorder %s18, 0
      %p101 = por %p99, %p100
      %p102 = scmp.ne.s32.totalorder %s94, %s96
      %p103 = scmp.eq.s32.totalorder %s23, 1
      %p104 = por %p102, %p103
      %p105 = scmp.ne.s32.totalorder %s96, %s97
      %p106 = scmp.eq.s32.totalorder %s23, 0
      %p107 = por %p105, %p106
      %p108 = scmp.ne.s32.totalorder %s96, %s97
      %p109 = scmp.eq.s32.totalorder %s24, 1
      %p110 = por %p108, %p109
      %p112 = scmp.ne.s32.totalorder %s97, %s111
      %p113 = scmp.eq.s32.totalorder %s24, 0
      %p114 = por %p112, %p113
      %s116 = sadd.s32 %s115, 1
      %p119 = scmp.eq.s32.totalorder %s18, 1
      %p120 = scmp.ne.s32.totalorder %s115, %s117
      %p121 = scmp.eq.s32.totalorder %s18, 0
      %p122 = por %p120, %p121
      %p123 = scmp.ne.s32.totalorder %s115, %s117
      %p124 = scmp.eq.s32.totalorder %s23, 1
      %p125 = por %p123, %p124
      %p126 = scmp.ne.s32.totalorder %s117, %s118
      %p127 = scmp.eq.s32.totalorder %s23, 0
      %p128 = por %p126, %p127
      %p129 = scmp.ne.s32.totalorder %s117, %s118
      %p130 = scmp.eq.s32.totalorder %s24, 1
      %p131 = por %p129, %p130
      %p133 = scmp.ne.s32.totalorder %s118, %s132
      %p134 = scmp.eq.s32.totalorder %s24, 0
      %p135 = por %p133, %p134
      %s136 = ssub.s32 %s18, %s25
      %p137 = scmp.eq.s32.totalorder %s136, 0
      %s139 = sadd.s32 %s138, 1
      %s140 = scalar_select %p137, %s138, %s139
      %p143 = pneg %p137
      %p144 = scmp.eq.s32.totalorder %s18, 1
      %p145 = por %p143, %p144
      %p146 = scmp.ne.s32.totalorder %s138, %s141
      %p147 = scmp.eq.s32.totalorder %s18, 0
      %p148 = por %p146, %p147
      %p149 = scmp.ne.s32.totalorder %s138, %s141
      %p150 = scmp.eq.s32.totalorder %s23, 1
      %p151 = por %p149, %p150
      %p152 = scmp.ne.s32.totalorder %s141, %s142
      %p153 = scmp.eq.s32.totalorder %s23, 0
      %p154 = por %p152, %p153
      %p155 = scmp.ne.s32.totalorder %s141, %s142
      %p156 = scmp.eq.s32.totalorder %s24, 1
      %p157 = por %p155, %p156
      %p159 = scmp.ne.s32.totalorder %s142, %s158
      %p160 = scmp.eq.s32.totalorder %s24, 0
      %p161 = por %p159, %p160
      %p162 = scmp.le.s32.totalorder 1, %s18
      %p163 = scmp.lt.s32.totalorder %s18, 3
      %p164 = pnand %p162, %p163
      %p165 = pneg %p164
      // Predicated region
      $region9: #{tpu_custom_call.1} parent=5 // pred_check
        _
      $region10: #{tpu_custom_call.1} parent=5 // pred_check_branch
        %167 = sbr.rel (%p164) target = $region12
      $region11: #{tpu_custom_call.1} parent=5 // pred_region
        %s168 = ssub.s32 %s18, 1
        // Predicated region
        $region13: #{tpu_custom_call.1} parent=11 // pred_check
          %p169 = pneg %p65
        $region14: #{tpu_custom_call.1} parent=11 // pred_check_branch
          %171 = sbr.rel (%p169) target = $region16
        $region15: #{tpu_custom_call.1} parent=11 // pred_region
          %s173 = ssub.s32 2048, 2048
          %174 = vsyncadd [#allocation6], %s173
          %s175 = sshll.u32 [#allocation5], 4
          %s176 = int_to_ptr.vmem [resolvable:$true] %s175
          %181 = dma.hbm_to_vmem [thread:$0]  %s1, 2048, %s176, [#allocation6], 128, 128, 8
        $region16: #{tpu_custom_call.1} parent=11 // pred_fallthru
          _
        // Predicated region
        $region17: #{tpu_custom_call.1} parent=11 // pred_check
          %p182 = pneg %p86
        $region18: #{tpu_custom_call.1} parent=11 // pred_check_branch
          %184 = sbr.rel (%p182) target = $region20
        $region19: #{tpu_custom_call.1} parent=11 // pred_region
          _
        $region20: #{tpu_custom_call.1} parent=11 // pred_fallthru
          _
        // Predicated region
        $region21: #{tpu_custom_call.1} parent=11 // pred_check
          %p185 = pneg %p107
        $region22: #{tpu_custom_call.1} parent=11 // pred_check_branch
          %187 = sbr.rel (%p185) target = $region24
        $region23: #{tpu_custom_call.1} parent=11 // pred_region
          %s189 = ssub.s32 2048, 2048
          %190 = vsyncadd [#allocation6], %s189
          %s191 = sshll.u32 [#allocation7], 4
          %s192 = int_to_ptr.vmem [resolvable:$true] %s191
          %197 = dma.hbm_to_vmem [thread:$0]  %s3, 2048, %s192, [#allocation6], 64, 64, 4
        $region24: #{tpu_custom_call.1} parent=11 // pred_fallthru
          _
        // Predicated region
        $region25: #{tpu_custom_call.1} parent=11 // pred_check
          %p198 = pneg %p128
        $region26: #{tpu_custom_call.1} parent=11 // pred_check_branch
          %200 = sbr.rel (%p198) target = $region28
        $region27: #{tpu_custom_call.1} parent=11 // pred_region
          _
        $region28: #{tpu_custom_call.1} parent=11 // pred_fallthru
          _
      $region12: #{tpu_custom_call.1} parent=5 // pred_fallthru
        _
      %p201 = scmp.lt.s32.totalorder %s18, 2
      // Predicated region
      $region29: #{tpu_custom_call.1} parent=5 // pred_check
        %p202 = pneg %p201
      $region30: #{tpu_custom_call.1} parent=5 // pred_check_branch
        %204 = sbr.rel (%p202) target = $region32
      $region31: #{tpu_custom_call.1} parent=5 // pred_region
        // Predicated region
        $region33: #{tpu_custom_call.1} parent=31 // pred_check
          %p205 = pneg %p38
        $region34: #{tpu_custom_call.1} parent=31 // pred_check_branch
          %207 = sbr.rel (%p205) target = $region36
        $region35: #{tpu_custom_call.1} parent=31 // pred_region
          %s208 = sand.u32 %s28, 1
          %s209 = scalar_lea.sflag [#allocation3], %s208
          %s210 = sand.u32 %s28, 1
          %s211 = smul.addr %s210, 128
          %s212 = scalar_lea.vmem [#allocation2], %s211
          %s213 = smul.u32 32, %s18
          %s215 = ssub.s32 2048, 2048
          %216 = vsyncadd %s209, %s215
          %s217 = smul.addr %s213, 64
          %s218 = scalar_lea.hbm %s0, %s217
          %s219 = sshll.u32 %s212, 4
          %s220 = int_to_ptr.vmem [resolvable:$true] %s219
          %225 = dma.hbm_to_vmem [thread:$0]  %s218, 2048, %s220, %s209, 64, 64, 4
        $region36: #{tpu_custom_call.1} parent=31 // pred_fallthru
          _
      $region32: #{tpu_custom_call.1} parent=5 // pred_fallthru
        _
      %p226 = scmp.le.s32.totalorder 1, %s18
      %p227 = scmp.lt.s32.totalorder %s18, 3
      %p228 = pnand %p226, %p227
      %p229 = pneg %p228
      // Predicated region
      $region37: #{tpu_custom_call.1} parent=5 // pred_check
        _
      $region38: #{tpu_custom_call.1} parent=5 // pred_check_branch
        %231 = sbr.rel (%p228) target = $region40
      $region39: #{tpu_custom_call.1} parent=5 // pred_region
        %s232 = ssub.s32 %s18, 1
        %s233 = sand.u32 %s31, 1
        %s234 = scalar_lea.sflag [#allocation3], %s233
        %s235 = sand.u32 %s31, 1
        %s236 = smul.addr %s235, 128
        %s237 = scalar_lea.vmem [#allocation2], %s236
        // Predicated region
        $region41: #{tpu_custom_call.1} parent=39 // pred_check
          %p238 = pneg %p44
        $region42: #{tpu_custom_call.1} parent=39 // pred_check_branch
          %240 = sbr.rel (%p238) target = $region44
        $region43: #{tpu_custom_call.1} parent=39 // pred_region
          %241 = dma.done %s234, 2048
        $region44: #{tpu_custom_call.1} parent=39 // pred_fallthru
          _
        // Predicated region
        $region45: #{tpu_custom_call.1} parent=39 // pred_check
          %p242 = pneg %p65
        $region46: #{tpu_custom_call.1} parent=39 // pred_check_branch
          %244 = sbr.rel (%p242) target = $region48
        $region47: #{tpu_custom_call.1} parent=39 // pred_region
          %245 = dma.done [#allocation6], 2048
        $region48: #{tpu_custom_call.1} parent=39 // pred_fallthru
          _
        // Predicated region
        $region49: #{tpu_custom_call.1} parent=39 // pred_check
          %p246 = pneg %p107
        $region50: #{tpu_custom_call.1} parent=39 // pred_check_branch
          %248 = sbr.rel (%p246) target = $region52
        $region51: #{tpu_custom_call.1} parent=39 // pred_region
          %249 = dma.done [#allocation6], 2048
        $region52: #{tpu_custom_call.1} parent=39 // pred_fallthru
          _
        %s250 = sand.u32 %s31, 1
        %s251 = scalar_lea.sflag [#allocation3], %s250
        %s252 = sand.u32 %s31, 1
        %s253 = smul.addr %s252, 128
        %s254 = scalar_lea.vmem [#allocation2], %s253
        %p255 = pneg %p44
        %p256 = pneg %p41
        %p257 = pneg %p65
        %p258 = pneg %p62
        %p259 = pneg %p86
        %p260 = pneg %p83
        %p261 = pneg %p107
        %p262 = pneg %p104
        %p263 = pneg %p128
        %p264 = pneg %p125
        %p265 = pneg %p154
        %p266 = pneg %p151
        %s267 = sand.u32 %s141, 1
        %s268 = scalar_lea.sflag [#allocation4], %s267
        %s269 = sand.u32 %s141, 1
        %s270 = smul.addr %s269, 128
        %s271 = scalar_lea.vmem [#allocation8], %s270
        %s272 = smul.u32 32, %s23
        %s273 = smul.u32 32, %s23
        %v275 = vld [vmem:[%s237] sm:$0xf]
        %v276 = vld [vmem:[%s237 + $0x4] sm:$0xf]
        %v277 = vld [vmem:[%s237 + $0x8] sm:$0xf]
        %v278 = vld [vmem:[%s237 + $0xc] sm:$0xf]
        %v279 = vld [vmem:[%s237 + $0x10] sm:$0xf]
        %v280 = vld [vmem:[%s237 + $0x14] sm:$0xf]
        %v281 = vld [vmem:[%s237 + $0x18] sm:$0xf]
        %v282 = vld [vmem:[%s237 + $0x1c] sm:$0xf]
        %v283 = vld [vmem:[%s237 + $0x20] sm:$0xf]
        %v284 = vld [vmem:[%s237 + $0x24] sm:$0xf]
        %v285 = vld [vmem:[%s237 + $0x28] sm:$0xf]
        %v286 = vld [vmem:[%s237 + $0x2c] sm:$0xf]
        %v287 = vld [vmem:[%s237 + $0x30] sm:$0xf]
        %v288 = vld [vmem:[%s237 + $0x34] sm:$0xf]
        %v289 = vld [vmem:[%s237 + $0x38] sm:$0xf]
        %v290 = vld [vmem:[%s237 + $0x3c] sm:$0xf]
        %v291 = vld [vmem:[%s237 + $0x40] sm:$0xf]
        %v292 = vld [vmem:[%s237 + $0x44] sm:$0xf]
        %v293 = vld [vmem:[%s237 + $0x48] sm:$0xf]
        %v294 = vld [vmem:[%s237 + $0x4c] sm:$0xf]
        %v295 = vld [vmem:[%s237 + $0x50] sm:$0xf]
        %v296 = vld [vmem:[%s237 + $0x54] sm:$0xf]
        %v297 = vld [vmem:[%s237 + $0x58] sm:$0xf]
        %v298 = vld [vmem:[%s237 + $0x5c] sm:$0xf]
        %v299 = vld [vmem:[%s237 + $0x60] sm:$0xf]
        %v300 = vld [vmem:[%s237 + $0x64] sm:$0xf]
        %v301 = vld [vmem:[%s237 + $0x68] sm:$0xf]
        %v302 = vld [vmem:[%s237 + $0x6c] sm:$0xf]
        %v303 = vld [vmem:[%s237 + $0x70] sm:$0xf]
        %v304 = vld [vmem:[%s237 + $0x74] sm:$0xf]
        %v305 = vld [vmem:[%s237 + $0x78] sm:$0xf]
        %v306 = vld [vmem:[%s237 + $0x7c] sm:$0xf]
        %v307 = vld [vmem:[#allocation5] sm:$0xff]
        %v308 = vld [vmem:[#allocation5 + $0x8] sm:$0xff]
        %v309 = vld [vmem:[#allocation5 + $0x10] sm:$0xff]
        %v310 = vld [vmem:[#allocation5 + $0x18] sm:$0xff]
        %v311 = vld [vmem:[#allocation5 + $0x20] sm:$0xff]
        %v312 = vld [vmem:[#allocation5 + $0x28] sm:$0xff]
        %v313 = vld [vmem:[#allocation5 + $0x30] sm:$0xff]
        %v314 = vld [vmem:[#allocation5 + $0x38] sm:$0xff]
        %v315 = vld [vmem:[#allocation5 + $0x40] sm:$0xff]
        %v316 = vld [vmem:[#allocation5 + $0x48] sm:$0xff]
        %v317 = vld [vmem:[#allocation5 + $0x50] sm:$0xff]
        %v318 = vld [vmem:[#allocation5 + $0x58] sm:$0xff]
        %v319 = vld [vmem:[#allocation5 + $0x60] sm:$0xff]
        %v320 = vld [vmem:[#allocation5 + $0x68] sm:$0xff]
        %v321 = vld [vmem:[#allocation5 + $0x70] sm:$0xff]
        %v322 = vld [vmem:[#allocation5 + $0x78] sm:$0xff]
        %v323 = vld [vmem:[%s2] sm:$0x3]
        %v325 = vlaneseq
        %v326 = vshrl.u32 %v325, 7
        %v327 = vsub.s32 0, %v326
        %v328 = vrot.slane %v323, %v327
        %v329 = vlaneseq
        %v330 = vshrl.u32 %v329, 7
        %v331 = vsub.s32 1, %v330
        %v332 = vrot.slane %v323, %v331
        %v367 = vunpack.c.l.b16 %v275
        %v368 = vunpack.c.l.b16 %v276
        %v369 = vunpack.c.l.b16 %v277
        %v370 = vunpack.c.l.b16 %v278
        %v371 = vunpack.c.l.b16 %v279
        %v372 = vunpack.c.l.b16 %v280
        %v373 = vunpack.c.l.b16 %v281
        %v374 = vunpack.c.l.b16 %v282
        %v375 = vunpack.c.l.b16 %v283
        %v376 = vunpack.c.l.b16 %v284
        %v377 = vunpack.c.l.b16 %v285
        %v378 = vunpack.c.l.b16 %v286
        %v379 = vunpack.c.l.b16 %v287
        %v380 = vunpack.c.l.b16 %v288
        %v381 = vunpack.c.l.b16 %v289
        %v382 = vunpack.c.l.b16 %v290
        %v383 = vunpack.c.l.b16 %v291
        %v384 = vunpack.c.l.b16 %v292
        %v385 = vunpack.c.l.b16 %v293
        %v386 = vunpack.c.l.b16 %v294
        %v387 = vunpack.c.l.b16 %v295
        %v388 = vunpack.c.l.b16 %v296
        %v389 = vunpack.c.l.b16 %v297
        %v390 = vunpack.c.l.b16 %v298
        %v391 = vunpack.c.l.b16 %v299
        %v392 = vunpack.c.l.b16 %v300
        %v393 = vunpack.c.l.b16 %v301
        %v394 = vunpack.c.l.b16 %v302
        %v395 = vunpack.c.l.b16 %v303
        %v396 = vunpack.c.l.b16 %v304
        %v397 = vunpack.c.l.b16 %v305
        %v398 = vunpack.c.l.b16 %v306
        %v399 = vpack.c.b16 %v368, %v367
        %v400 = vpack.c.b16 %v370, %v369
        %v401 = vpack.c.b16 %v372, %v371
        %v402 = vpack.c.b16 %v374, %v373
        %v403 = vpack.c.b16 %v376, %v375
        %v404 = vpack.c.b16 %v378, %v377
        %v405 = vpack.c.b16 %v380, %v379
        %v406 = vpack.c.b16 %v382, %v381
        %v407 = vpack.c.b16 %v384, %v383
        %v408 = vpack.c.b16 %v386, %v385
        %v409 = vpack.c.b16 %v388, %v387
        %v410 = vpack.c.b16 %v390, %v389
        %v411 = vpack.c.b16 %v392, %v391
        %v412 = vpack.c.b16 %v394, %v393
        %v413 = vpack.c.b16 %v396, %v395
        %v414 = vpack.c.b16 %v398, %v397
        %v447 = vunpack.c.l.b16 %v307
        %v448 = vunpack.c.h.b16 %v307
        %v449 = vunpack.c.l.b16 %v308
        %v450 = vunpack.c.h.b16 %v308
        %v451 = vunpack.c.l.b16 %v309
        %v452 = vunpack.c.h.b16 %v309
        %v453 = vunpack.c.l.b16 %v310
        %v454 = vunpack.c.h.b16 %v310
        %v455 = vunpack.c.l.b16 %v311
        %v456 = vunpack.c.h.b16 %v311
        %v457 = vunpack.c.l.b16 %v312
        %v458 = vunpack.c.h.b16 %v312
        %v459 = vunpack.c.l.b16 %v313
        %v460 = vunpack.c.h.b16 %v313
        %v461 = vunpack.c.l.b16 %v314
        %v462 = vunpack.c.h.b16 %v314
        %v463 = vunpack.c.l.b16 %v315
        %v464 = vunpack.c.h.b16 %v315
        %v465 = vunpack.c.l.b16 %v316
        %v466 = vunpack.c.h.b16 %v316
        %v467 = vunpack.c.l.b16 %v317
        %v468 = vunpack.c.h.b16 %v317
        %v469 = vunpack.c.l.b16 %v318
        %v470 = vunpack.c.h.b16 %v318
        %v471 = vunpack.c.l.b16 %v319
        %v472 = vunpack.c.h.b16 %v319
        %v473 = vunpack.c.l.b16 %v320
        %v474 = vunpack.c.h.b16 %v320
        %v475 = vunpack.c.l.b16 %v321
        %v476 = vunpack.c.h.b16 %v321
        %v477 = vunpack.c.l.b16 %v322
        %v478 = vunpack.c.h.b16 %v322
        %v479 = vpack.c.b16 %v449, %v447
        %v480 = vpack.c.b16 %v450, %v448
        %v481 = vpack.c.b16 %v453, %v451
        %v482 = vpack.c.b16 %v454, %v452
        %v483 = vpack.c.b16 %v457, %v455
        %v484 = vpack.c.b16 %v458, %v456
        %v485 = vpack.c.b16 %v461, %v459
        %v486 = vpack.c.b16 %v462, %v460
        %v487 = vpack.c.b16 %v465, %v463
        %v488 = vpack.c.b16 %v466, %v464
        %v489 = vpack.c.b16 %v469, %v467
        %v490 = vpack.c.b16 %v470, %v468
        %v491 = vpack.c.b16 %v473, %v471
        %v492 = vpack.c.b16 %v474, %v472
        %v493 = vpack.c.b16 %v477, %v475
        %v494 = vpack.c.b16 %v478, %v476
        %511 = vmatprep.subr.bf16.mxu0 %v480
        %512 = vmatpush1.bf16.msra.mxu0 %v479
        %513 = vmatprep.subr.bf16.mxu0 %v482
        %514 = vmatpush1.bf16.msra.mxu0 %v481
        %515 = vmatprep.subr.bf16.mxu0 %v484
        %516 = vmatpush1.bf16.msra.mxu0 %v483
        %517 = vmatprep.subr.bf16.mxu0 %v486
        %518 = vmatpush1.bf16.msra.mxu0 %v485
        %519 = vmatprep.subr.bf16.mxu0 %v488
        %520 = vmatpush1.bf16.msra.mxu0 %v487
        %521 = vmatprep.subr.bf16.mxu0 %v490
        %522 = vmatpush1.bf16.msra.mxu0 %v489
        %523 = vmatprep.subr.bf16.mxu0 %v492
        %524 = vmatpush1.bf16.msra.mxu0 %v491
        %525 = vmatprep.subr.bf16.mxu0 %v494
        %526 = vmatpush1.bf16.msra.mxu0 %v493
        %527 = vmatprep.subr.bf16.mxu0 0
        %528 = vmatpush1.bf16.msra.mxu0 0
        %529 = vmatprep.subr.bf16.mxu0 0
        %530 = vmatpush1.bf16.msra.mxu0 0
        %531 = vmatprep.subr.bf16.mxu0 0
        %532 = vmatpush1.bf16.msra.mxu0 0
        %533 = vmatprep.subr.bf16.mxu0 0
        %534 = vmatpush1.bf16.msra.mxu0 0
        %535 = vmatprep.subr.bf16.mxu0 0
        %536 = vmatpush1.bf16.msra.mxu0 0
        %537 = vmatprep.subr.bf16.mxu0 0
        %538 = vmatpush1.bf16.msra.mxu0 0
        %539 = vmatprep.subr.bf16.mxu0 0
        %540 = vmatpush1.bf16.msra.mxu0 0
        %541 = vmatprep.subr.bf16.mxu0 0
        %542 = vmatpush1.bf16.msra.mxu0 0
        %543 = vmatprep.mubr.bf16.mxu0 0
        %544 = vmatmul.mubr.bf16.gmra.mrb[0].mxu0 %v399
        %v545 = vpop.f32.mrb[0].mxu0
        %v546 = vadd.f32 %v328, %v545
        %v547 = vpop.f32.mrb[0].mxu0
        %v548 = vadd.f32 %v332, %v547
        %v549 = vpop.f32.mrb[0].mxu0
        %v550 = vadd.f32 %v328, %v549
        %v551 = vpop.f32.mrb[0].mxu0
        %v552 = vadd.f32 %v332, %v551
        %553 = vmatprep.mubr.bf16.mxu0 0
        %554 = vmatmul.mubr.bf16.gmra.mrb[0].mxu0 %v400
        %v555 = vpop.f32.mrb[0].mxu0
        %v556 = vadd.f32 %v328, %v555
        %v557 = vpop.f32.mrb[0].mxu0
        %v558 = vadd.f32 %v332, %v557
        %v559 = vpop.f32.mrb[0].mxu0
        %v560 = vadd.f32 %v328, %v559
        %v561 = vpop.f32.mrb[0].mxu0
        %v562 = vadd.f32 %v332, %v561
        %563 = vmatprep.mubr.bf16.mxu0 0
        %564 = vmatmul.mubr.bf16.gmra.mrb[0].mxu0 %v401
        %v565 = vpop.f32.mrb[0].mxu0
        %v566 = vadd.f32 %v328, %v565
        %v567 = vpop.f32.mrb[0].mxu0
        %v568 = vadd.f32 %v332, %v567
        %v569 = vpop.f32.mrb[0].mxu0
        %v570 = vadd.f32 %v328, %v569
        %v571 = vpop.f32.mrb[0].mxu0
        %v572 = vadd.f32 %v332, %v571
        %573 = vmatprep.mubr.bf16.mxu0 0
        %574 = vmatmul.mubr.bf16.gmra.mrb[0].mxu0 %v402
        %v575 = vpop.f32.mrb[0].mxu0
        %v576 = vadd.f32 %v328, %v575
        %v577 = vpop.f32.mrb[0].mxu0
        %v578 = vadd.f32 %v332, %v577
        %v579 = vpop.f32.mrb[0].mxu0
        %v580 = vadd.f32 %v328, %v579
        %v581 = vpop.f32.mrb[0].mxu0
        %v582 = vadd.f32 %v332, %v581
        %583 = vmatprep.mubr.bf16.mxu0 0
        %584 = vmatmul.mubr.bf16.gmra.mrb[0].mxu0 %v403
        %v585 = vpop.f32.mrb[0].mxu0
        %v586 = vadd.f32 %v328, %v585
        %v587 = vpop.f32.mrb[0].mxu0
        %v588 = vadd.f32 %v332, %v587
        %v589 = vpop.f32.mrb[0].mxu0
        %v590 = vadd.f32 %v328, %v589
        %v591 = vpop.f32.mrb[0].mxu0
        %v592 = vadd.f32 %v332, %v591
        %593 = vmatprep.mubr.bf16.mxu0 0
        %594 = vmatmul.mubr.bf16.gmra.mrb[0].mxu0 %v404
        %v595 = vpop.f32.mrb[0].mxu0
        %v596 = vadd.f32 %v328, %v595
        %v597 = vpop.f32.mrb[0].mxu0
        %v598 = vadd.f32 %v332, %v597
        %v599 = vpop.f32.mrb[0].mxu0
        %v600 = vadd.f32 %v328, %v599
        %v601 = vpop.f32.mrb[0].mxu0
        %v602 = vadd.f32 %v332, %v601
        %603 = vmatprep.mubr.bf16.mxu0 0
        %604 = vmatmul.mubr.bf16.gmra.mrb[0].mxu0 %v405
        %v605 = vpop.f32.mrb[0].mxu0
        %v606 = vadd.f32 %v328, %v605
        %v607 = vpop.f32.mrb[0].mxu0
        %v608 = vadd.f32 %v332, %v607
        %v609 = vpop.f32.mrb[0].mxu0
        %v610 = vadd.f32 %v328, %v609
        %v611 = vpop.f32.mrb[0].mxu0
        %v612 = vadd.f32 %v332, %v611
        %613 = vmatprep.mubr.bf16.mxu0 0
        %614 = vmatmul.mubr.bf16.gmra.mrb[0].mxu0 %v406
        %v615 = vpop.f32.mrb[0].mxu0
        %v616 = vadd.f32 %v328, %v615
        %v617 = vpop.f32.mrb[0].mxu0
        %v618 = vadd.f32 %v332, %v617
        %v619 = vpop.f32.mrb[0].mxu0
        %v620 = vadd.f32 %v328, %v619
        %v621 = vpop.f32.mrb[0].mxu0
        %v622 = vadd.f32 %v332, %v621
        %623 = vmatprep.mubr.bf16.mxu0 0
        %624 = vmatmul.mubr.bf16.gmra.mrb[0].mxu0 %v407
        %v625 = vpop.f32.mrb[0].mxu0
        %v626 = vadd.f32 %v328, %v625
        %v627 = vpop.f32.mrb[0].mxu0
        %v628 = vadd.f32 %v332, %v627
        %v629 = vpop.f32.mrb[0].mxu0
        %v630 = vadd.f32 %v328, %v629
        %v631 = vpop.f32.mrb[0].mxu0
        %v632 = vadd.f32 %v332, %v631
        %633 = vmatprep.mubr.bf16.mxu0 0
        %634 = vmatmul.mubr.bf16.gmra.mrb[0].mxu0 %v408
        %v635 = vpop.f32.mrb[0].mxu0
        %v636 = vadd.f32 %v328, %v635
        %v637 = vpop.f32.mrb[0].mxu0
        %v638 = vadd.f32 %v332, %v637
        %v639 = vpop.f32.mrb[0].mxu0
        %v640 = vadd.f32 %v328, %v639
        %v641 = vpop.f32.mrb[0].mxu0
        %v642 = vadd.f32 %v332, %v641
        %643 = vmatprep.mubr.bf16.mxu0 0
        %644 = vmatmul.mubr.bf16.gmra.mrb[0].mxu0 %v409
        %v645 = vpop.f32.mrb[0].mxu0
        %v646 = vadd.f32 %v328, %v645
        %v647 = vpop.f32.mrb[0].mxu0
        %v648 = vadd.f32 %v332, %v647
        %v649 = vpop.f32.mrb[0].mxu0
        %v650 = vadd.f32 %v328, %v649
        %v651 = vpop.f32.mrb[0].mxu0
        %v652 = vadd.f32 %v332, %v651
        %653 = vmatprep.mubr.bf16.mxu0 0
        %654 = vmatmul.mubr.bf16.gmra.mrb[0].mxu0 %v410
        %v655 = vpop.f32.mrb[0].mxu0
        %v656 = vadd.f32 %v328, %v655
        %v657 = vpop.f32.mrb[0].mxu0
        %v658 = vadd.f32 %v332, %v657
        %v659 = vpop.f32.mrb[0].mxu0
        %v660 = vadd.f32 %v328, %v659
        %v661 = vpop.f32.mrb[0].mxu0
        %v662 = vadd.f32 %v332, %v661
        %663 = vmatprep.mubr.bf16.mxu0 0
        %664 = vmatmul.mubr.bf16.gmra.mrb[0].mxu0 %v411
        %v665 = vpop.f32.mrb[0].mxu0
        %v666 = vadd.f32 %v328, %v665
        %v667 = vpop.f32.mrb[0].mxu0
        %v668 = vadd.f32 %v332, %v667
        %v669 = vpop.f32.mrb[0].mxu0
        %v670 = vadd.f32 %v328, %v669
        %v671 = vpop.f32.mrb[0].mxu0
        %v672 = vadd.f32 %v332, %v671
        %673 = vmatprep.mubr.bf16.mxu0 0
        %674 = vmatmul.mubr.bf16.gmra.mrb[0].mxu0 %v412
        %v675 = vpop.f32.mrb[0].mxu0
        %v676 = vadd.f32 %v328, %v675
        %v677 = vpop.f32.mrb[0].mxu0
        %v678 = vadd.f32 %v332, %v677
        %v679 = vpop.f32.mrb[0].mxu0
        %v680 = vadd.f32 %v328, %v679
        %v681 = vpop.f32.mrb[0].mxu0
        %v682 = vadd.f32 %v332, %v681
        %683 = vmatprep.mubr.bf16.mxu0 0
        %684 = vmatmul.mubr.bf16.gmra.mrb[0].mxu0 %v413
        %v685 = vpop.f32.mrb[0].mxu0
        %v686 = vadd.f32 %v328, %v685
        %v687 = vpop.f32.mrb[0].mxu0
        %v688 = vadd.f32 %v332, %v687
        %v689 = vpop.f32.mrb[0].mxu0
        %v690 = vadd.f32 %v328, %v689
        %v691 = vpop.f32.mrb[0].mxu0
        %v692 = vadd.f32 %v332, %v691
        %693 = vmatprep.mubr.bf16.mxu0 0
        %694 = vmatmul.mubr.bf16.gmra.mrb[0].mxu0 %v414
        %v695 = vpop.f32.mrb[0].mxu0
        %v696 = vadd.f32 %v328, %v695
        %v697 = vpop.f32.mrb[0].mxu0
        %v698 = vadd.f32 %v332, %v697
        %v699 = vpop.f32.mrb[0].mxu0
        %v700 = vadd.f32 %v328, %v699
        %v701 = vpop.f32.mrb[0].mxu0
        %v702 = vadd.f32 %v332, %v701
        %703 = vdwg.mxu0
        %v704 = vmul.f32 %v546, 0.5
        %v705 = vmul.f32 %v548, 0.5
        %v706 = vmul.f32 %v550, 0.5
        %v707 = vmul.f32 %v552, 0.5
        %v708 = vmul.f32 %v556, 0.5
        %v709 = vmul.f32 %v558, 0.5
        %v710 = vmul.f32 %v560, 0.5
        %v711 = vmul.f32 %v562, 0.5
        %v712 = vmul.f32 %v566, 0.5
        %v713 = vmul.f32 %v568, 0.5
        %v714 = vmul.f32 %v570, 0.5
        %v715 = vmul.f32 %v572, 0.5
        %v716 = vmul.f32 %v576, 0.5
        %v717 = vmul.f32 %v578, 0.5
        %v718 = vmul.f32 %v580, 0.5
        %v719 = vmul.f32 %v582, 0.5
        %v720 = vmul.f32 %v586, 0.5
        %v721 = vmul.f32 %v588, 0.5
        %v722 = vmul.f32 %v590, 0.5
        %v723 = vmul.f32 %v592, 0.5
        %v724 = vmul.f32 %v596, 0.5
        %v725 = vmul.f32 %v598, 0.5
        %v726 = vmul.f32 %v600, 0.5
        %v727 = vmul.f32 %v602, 0.5
        %v728 = vmul.f32 %v606, 0.5
        %v729 = vmul.f32 %v608, 0.5
        %v730 = vmul.f32 %v610, 0.5
        %v731 = vmul.f32 %v612, 0.5
        %v732 = vmul.f32 %v616, 0.5
        %v733 = vmul.f32 %v618, 0.5
        %v734 = vmul.f32 %v620, 0.5
        %v735 = vmul.f32 %v622, 0.5
        %v736 = vmul.f32 %v626, 0.5
        %v737 = vmul.f32 %v628, 0.5
        %v738 = vmul.f32 %v630, 0.5
        %v739 = vmul.f32 %v632, 0.5
        %v740 = vmul.f32 %v636, 0.5
        %v741 = vmul.f32 %v638, 0.5
        %v742 = vmul.f32 %v640, 0.5
        %v743 = vmul.f32 %v642, 0.5
        %v744 = vmul.f32 %v646, 0.5
        %v745 = vmul.f32 %v648, 0.5
        %v746 = vmul.f32 %v650, 0.5
        %v747 = vmul.f32 %v652, 0.5
        %v748 = vmul.f32 %v656, 0.5
        %v749 = vmul.f32 %v658, 0.5
        %v750 = vmul.f32 %v660, 0.5
        %v751 = vmul.f32 %v662, 0.5
        %v752 = vmul.f32 %v666, 0.5
        %v753 = vmul.f32 %v668, 0.5
        %v754 = vmul.f32 %v670, 0.5
        %v755 = vmul.f32 %v672, 0.5
        %v756 = vmul.f32 %v676, 0.5
        %v757 = vmul.f32 %v678, 0.5
        %v758 = vmul.f32 %v680, 0.5
        %v759 = vmul.f32 %v682, 0.5
        %v760 = vmul.f32 %v686, 0.5
        %v761 = vmul.f32 %v688, 0.5
        %v762 = vmul.f32 %v690, 0.5
        %v763 = vmul.f32 %v692, 0.5
        %v764 = vmul.f32 %v696, 0.5
        %v765 = vmul.f32 %v698, 0.5
        %v766 = vmul.f32 %v700, 0.5
        %v767 = vmul.f32 %v702, 0.5
        %v768 = vmul.f32 %v546, 0.70710677
        %v769 = vmul.f32 %v548, 0.70710677
        %v770 = vmul.f32 %v550, 0.70710677
        %v771 = vmul.f32 %v552, 0.70710677
        %v772 = vmul.f32 %v556, 0.70710677
        %v773 = vmul.f32 %v558, 0.70710677
        %v774 = vmul.f32 %v560, 0.70710677
        %v775 = vmul.f32 %v562, 0.70710677
        %v776 = vmul.f32 %v566, 0.70710677
        %v777 = vmul.f32 %v568, 0.70710677
        %v778 = vmul.f32 %v570, 0.70710677
        %v779 = vmul.f32 %v572, 0.70710677
        %v780 = vmul.f32 %v576, 0.70710677
        %v781 = vmul.f32 %v578, 0.70710677
        %v782 = vmul.f32 %v580, 0.70710677
        %v783 = vmul.f32 %v582, 0.70710677
        %v784 = vmul.f32 %v586, 0.70710677
        %v785 = vmul.f32 %v588, 0.70710677
        %v786 = vmul.f32 %v590, 0.70710677
        %v787 = vmul.f32 %v592, 0.70710677
        %v788 = vmul.f32 %v596, 0.70710677
        %v789 = vmul.f32 %v598, 0.70710677
        %v790 = vmul.f32 %v600, 0.70710677
        %v791 = vmul.f32 %v602, 0.70710677
        %v792 = vmul.f32 %v606, 0.70710677
        %v793 = vmul.f32 %v608, 0.70710677
        %v794 = vmul.f32 %v610, 0.70710677
        %v795 = vmul.f32 %v612, 0.70710677
        %v796 = vmul.f32 %v616, 0.70710677
        %v797 = vmul.f32 %v618, 0.70710677
        %v798 = vmul.f32 %v620, 0.70710677
        %v799 = vmul.f32 %v622, 0.70710677
        %v800 = vmul.f32 %v626, 0.70710677
        %v801 = vmul.f32 %v628, 0.70710677
        %v802 = vmul.f32 %v630, 0.70710677
        %v803 = vmul.f32 %v632, 0.70710677
        %v804 = vmul.f32 %v636, 0.70710677
        %v805 = vmul.f32 %v638, 0.70710677
        %v806 = vmul.f32 %v640, 0.70710677
        %v807 = vmul.f32 %v642, 0.70710677
        %v808 = vmul.f32 %v646, 0.70710677
        %v809 = vmul.f32 %v648, 0.70710677
        %v810 = vmul.f32 %v650, 0.70710677
        %v811 = vmul.f32 %v652, 0.70710677
        %v812 = vmul.f32 %v656, 0.70710677
        %v813 = vmul.f32 %v658, 0.70710677
        %v814 = vmul.f32 %v660, 0.70710677
        %v815 = vmul.f32 %v662, 0.70710677
        %v816 = vmul.f32 %v666, 0.70710677
        %v817 = vmul.f32 %v668, 0.70710677
        %v818 = vmul.f32 %v670, 0.70710677
        %v819 = vmul.f32 %v672, 0.70710677
        %v820 = vmul.f32 %v676, 0.70710677
        %v821 = vmul.f32 %v678, 0.70710677
        %v822 = vmul.f32 %v680, 0.70710677
        %v823 = vmul.f32 %v682, 0.70710677
        %v824 = vmul.f32 %v686, 0.70710677
        %v825 = vmul.f32 %v688, 0.70710677
        %v826 = vmul.f32 %v690, 0.70710677
        %v827 = vmul.f32 %v692, 0.70710677
        %v828 = vmul.f32 %v696, 0.70710677
        %v829 = vmul.f32 %v698, 0.70710677
        %v830 = vmul.f32 %v700, 0.70710677
        %v831 = vmul.f32 %v702, 0.70710677
        %v832 = vand.u32 2147483647, %v768
        %v833 = vand.u32 2147483647, %v769
        %v834 = vand.u32 2147483647, %v770
        %v835 = vand.u32 2147483647, %v771
        %v836 = vand.u32 2147483647, %v772
        %v837 = vand.u32 2147483647, %v773
        %v838 = vand.u32 2147483647, %v774
        %v839 = vand.u32 2147483647, %v775
        %v840 = vand.u32 2147483647, %v776
        %v841 = vand.u32 2147483647, %v777
        %v842 = vand.u32 2147483647, %v778
        %v843 = vand.u32 2147483647, %v779
        %v844 = vand.u32 2147483647, %v780
        %v845 = vand.u32 2147483647, %v781
        %v846 = vand.u32 2147483647, %v782
        %v847 = vand.u32 2147483647, %v783
        %v848 = vand.u32 2147483647, %v784
        %v849 = vand.u32 2147483647, %v785
        %v850 = vand.u32 2147483647, %v786
        %v851 = vand.u32 2147483647, %v787
        %v852 = vand.u32 2147483647, %v788
        %v853 = vand.u32 2147483647, %v789
        %v854 = vand.u32 2147483647, %v790
        %v855 = vand.u32 2147483647, %v791
        %v856 = vand.u32 2147483647, %v792
        %v857 = vand.u32 2147483647, %v793
        %v858 = vand.u32 2147483647, %v794
        %v859 = vand.u32 2147483647, %v795
        %v860 = vand.u32 2147483647, %v796
        %v861 = vand.u32 2147483647, %v797
        %v862 = vand.u32 2147483647, %v798
        %v863 = vand.u32 2147483647, %v799
        %v864 = vand.u32 2147483647, %v800
        %v865 = vand.u32 2147483647, %v801
        %v866 = vand.u32 2147483647, %v802
        %v867 = vand.u32 2147483647, %v803
        %v868 = vand.u32 2147483647, %v804
        %v869 = vand.u32 2147483647, %v805
        %v870 = vand.u32 2147483647, %v806
        %v871 = vand.u32 2147483647, %v807
        %v872 = vand.u32 2147483647, %v808
        %v873 = vand.u32 2147483647, %v809
        %v874 = vand.u32 2147483647, %v810
        %v875 = vand.u32 2147483647, %v811
        %v876 = vand.u32 2147483647, %v812
        %v877 = vand.u32 2147483647, %v813
        %v878 = vand.u32 2147483647, %v814
        %v879 = vand.u32 2147483647, %v815
        %v880 = vand.u32 2147483647, %v816
        %v881 = vand.u32 2147483647, %v817
        %v882 = vand.u32 2147483647, %v818
        %v883 = vand.u32 2147483647, %v819
        %v884 = vand.u32 2147483647, %v820
        %v885 = vand.u32 2147483647, %v821
        %v886 = vand.u32 2147483647, %v822
        %v887 = vand.u32 2147483647, %v823
        %v888 = vand.u32 2147483647, %v824
        %v889 = vand.u32 2147483647, %v825
        %v890 = vand.u32 2147483647, %v826
        %v891 = vand.u32 2147483647, %v827
        %v892 = vand.u32 2147483647, %v828
        %v893 = vand.u32 2147483647, %v829
        %v894 = vand.u32 2147483647, %v830
        %v895 = vand.u32 2147483647, %v831
        %v896 = vmul.f32 %v832, 0.3275911
        %v897 = vmul.f32 %v833, 0.3275911
        %v898 = vmul.f32 %v834, 0.3275911
        %v899 = vmul.f32 %v835, 0.3275911
        %v900 = vmul.f32 %v836, 0.3275911
        %v901 = vmul.f32 %v837, 0.3275911
        %v902 = vmul.f32 %v838, 0.3275911
        %v903 = vmul.f32 %v839, 0.3275911
        %v904 = vmul.f32 %v840, 0.3275911
        %v905 = vmul.f32 %v841, 0.3275911
        %v906 = vmul.f32 %v842, 0.3275911
        %v907 = vmul.f32 %v843, 0.3275911
        %v908 = vmul.f32 %v844, 0.3275911
        %v909 = vmul.f32 %v845, 0.3275911
        %v910 = vmul.f32 %v846, 0.3275911
        %v911 = vmul.f32 %v847, 0.3275911
        %v912 = vmul.f32 %v848, 0.3275911
        %v913 = vmul.f32 %v849, 0.3275911
        %v914 = vmul.f32 %v850, 0.3275911
        %v915 = vmul.f32 %v851, 0.3275911
        %v916 = vmul.f32 %v852, 0.3275911
        %v917 = vmul.f32 %v853, 0.3275911
        %v918 = vmul.f32 %v854, 0.3275911
        %v919 = vmul.f32 %v855, 0.3275911
        %v920 = vmul.f32 %v856, 0.3275911
        %v921 = vmul.f32 %v857, 0.3275911
        %v922 = vmul.f32 %v858, 0.3275911
        %v923 = vmul.f32 %v859, 0.3275911
        %v924 = vmul.f32 %v860, 0.3275911
        %v925 = vmul.f32 %v861, 0.3275911
        %v926 = vmul.f32 %v862, 0.3275911
        %v927 = vmul.f32 %v863, 0.3275911
        %v928 = vmul.f32 %v864, 0.3275911
        %v929 = vmul.f32 %v865, 0.3275911
        %v930 = vmul.f32 %v866, 0.3275911
        %v931 = vmul.f32 %v867, 0.3275911
        %v932 = vmul.f32 %v868, 0.3275911
        %v933 = vmul.f32 %v869, 0.3275911
        %v934 = vmul.f32 %v870, 0.3275911
        %v935 = vmul.f32 %v871, 0.3275911
        %v936 = vmul.f32 %v872, 0.3275911
        %v937 = vmul.f32 %v873, 0.3275911
        %v938 = vmul.f32 %v874, 0.3275911
        %v939 = vmul.f32 %v875, 0.3275911
        %v940 = vmul.f32 %v876, 0.3275911
        %v941 = vmul.f32 %v877, 0.3275911
        %v942 = vmul.f32 %v878, 0.3275911
        %v943 = vmul.f32 %v879, 0.3275911
        %v944 = vmul.f32 %v880, 0.3275911
        %v945 = vmul.f32 %v881, 0.3275911
        %v946 = vmul.f32 %v882, 0.3275911
        %v947 = vmul.f32 %v883, 0.3275911
        %v948 = vmul.f32 %v884, 0.3275911
        %v949 = vmul.f32 %v885, 0.3275911
        %v950 = vmul.f32 %v886, 0.3275911
        %v951 = vmul.f32 %v887, 0.3275911
        %v952 = vmul.f32 %v888, 0.3275911
        %v953 = vmul.f32 %v889, 0.3275911
        %v954 = vmul.f32 %v890, 0.3275911
        %v955 = vmul.f32 %v891, 0.3275911
        %v956 = vmul.f32 %v892, 0.3275911
        %v957 = vmul.f32 %v893, 0.3275911
        %v958 = vmul.f32 %v894, 0.3275911
        %v959 = vmul.f32 %v895, 0.3275911
        %v960 = vadd.f32 %v896, 1.0
        %v961 = vadd.f32 %v897, 1.0
        %v962 = vadd.f32 %v898, 1.0
        %v963 = vadd.f32 %v899, 1.0
        %v964 = vadd.f32 %v900, 1.0
        %v965 = vadd.f32 %v901, 1.0
        %v966 = vadd.f32 %v902, 1.0
        %v967 = vadd.f32 %v903, 1.0
        %v968 = vadd.f32 %v904, 1.0
        %v969 = vadd.f32 %v905, 1.0
        %v970 = vadd.f32 %v906, 1.0
        %v971 = vadd.f32 %v907, 1.0
        %v972 = vadd.f32 %v908, 1.0
        %v973 = vadd.f32 %v909, 1.0
        %v974 = vadd.f32 %v910, 1.0
        %v975 = vadd.f32 %v911, 1.0
        %v976 = vadd.f32 %v912, 1.0
        %v977 = vadd.f32 %v913, 1.0
        %v978 = vadd.f32 %v914, 1.0
        %v979 = vadd.f32 %v915, 1.0
        %v980 = vadd.f32 %v916, 1.0
        %v981 = vadd.f32 %v917, 1.0
        %v982 = vadd.f32 %v918, 1.0
        %v983 = vadd.f32 %v919, 1.0
        %v984 = vadd.f32 %v920, 1.0
        %v985 = vadd.f32 %v921, 1.0
        %v986 = vadd.f32 %v922, 1.0
        %v987 = vadd.f32 %v923, 1.0
        %v988 = vadd.f32 %v924, 1.0
        %v989 = vadd.f32 %v925, 1.0
        %v990 = vadd.f32 %v926, 1.0
        %v991 = vadd.f32 %v927, 1.0
        %v992 = vadd.f32 %v928, 1.0
        %v993 = vadd.f32 %v929, 1.0
        %v994 = vadd.f32 %v930, 1.0
        %v995 = vadd.f32 %v931, 1.0
        %v996 = vadd.f32 %v932, 1.0
        %v997 = vadd.f32 %v933, 1.0
        %v998 = vadd.f32 %v934, 1.0
        %v999 = vadd.f32 %v935, 1.0
        %v1000 = vadd.f32 %v936, 1.0
        %v1001 = vadd.f32 %v937, 1.0
        %v1002 = vadd.f32 %v938, 1.0
        %v1003 = vadd.f32 %v939, 1.0
        %v1004 = vadd.f32 %v940, 1.0
        %v1005 = vadd.f32 %v941, 1.0
        %v1006 = vadd.f32 %v942, 1.0
        %v1007 = vadd.f32 %v943, 1.0
        %v1008 = vadd.f32 %v944, 1.0
        %v1009 = vadd.f32 %v945, 1.0
        %v1010 = vadd.f32 %v946, 1.0
        %v1011 = vadd.f32 %v947, 1.0
        %v1012 = vadd.f32 %v948, 1.0
        %v1013 = vadd.f32 %v949, 1.0
        %v1014 = vadd.f32 %v950, 1.0
        %v1015 = vadd.f32 %v951, 1.0
        %v1016 = vadd.f32 %v952, 1.0
        %v1017 = vadd.f32 %v953, 1.0
        %v1018 = vadd.f32 %v954, 1.0
        %v1019 = vadd.f32 %v955, 1.0
        %v1020 = vadd.f32 %v956, 1.0
        %v1021 = vadd.f32 %v957, 1.0
        %v1022 = vadd.f32 %v958, 1.0
        %v1023 = vadd.f32 %v959, 1.0
        %v1024 = vrcp.pop %v960
        %v1025 = vmul.f32 1.0, %v1024
        %v1026 = vrcp.pop %v961
        %v1027 = vmul.f32 1.0, %v1026
        %v1028 = vrcp.pop %v962
        %v1029 = vmul.f32 1.0, %v1028
        %v1030 = vrcp.pop %v963
        %v1031 = vmul.f32 1.0, %v1030
        %v1032 = vrcp.pop %v964
        %v1033 = vmul.f32 1.0, %v1032
        %v1034 = vrcp.pop %v965
        %v1035 = vmul.f32 1.0, %v1034
        %v1036 = vrcp.pop %v966
        %v1037 = vmul.f32 1.0, %v1036
        %v1038 = vrcp.pop %v967
        %v1039 = vmul.f32 1.0, %v1038
        %v1040 = vrcp.pop %v968
        %v1041 = vmul.f32 1.0, %v1040
        %v1042 = vrcp.pop %v969
        %v1043 = vmul.f32 1.0, %v1042
        %v1044 = vrcp.pop %v970
        %v1045 = vmul.f32 1.0, %v1044
        %v1046 = vrcp.pop %v971
        %v1047 = vmul.f32 1.0, %v1046
        %v1048 = vrcp.pop %v972
        %v1049 = vmul.f32 1.0, %v1048
        %v1050 = vrcp.pop %v973
        %v1051 = vmul.f32 1.0, %v1050
        %v1052 = vrcp.pop %v974
        %v1053 = vmul.f32 1.0, %v1052
        %v1054 = vrcp.pop %v975
        %v1055 = vmul.f32 1.0, %v1054
        %v1056 = vrcp.pop %v976
        %v1057 = vmul.f32 1.0, %v1056
        %v1058 = vrcp.pop %v977
        %v1059 = vmul.f32 1.0, %v1058
        %v1060 = vrcp.pop %v978
        %v1061 = vmul.f32 1.0, %v1060
        %v1062 = vrcp.pop %v979
        %v1063 = vmul.f32 1.0, %v1062
        %v1064 = vrcp.pop %v980
        %v1065 = vmul.f32 1.0, %v1064
        %v1066 = vrcp.pop %v981
        %v1067 = vmul.f32 1.0, %v1066
        %v1068 = vrcp.pop %v982
        %v1069 = vmul.f32 1.0, %v1068
        %v1070 = vrcp.pop %v983
        %v1071 = vmul.f32 1.0, %v1070
        %v1072 = vrcp.pop %v984
        %v1073 = vmul.f32 1.0, %v1072
        %v1074 = vrcp.pop %v985
        %v1075 = vmul.f32 1.0, %v1074
        %v1076 = vrcp.pop %v986
        %v1077 = vmul.f32 1.0, %v1076
        %v1078 = vrcp.pop %v987
        %v1079 = vmul.f32 1.0, %v1078
        %v1080 = vrcp.pop %v988
        %v1081 = vmul.f32 1.0, %v1080
        %v1082 = vrcp.pop %v989
        %v1083 = vmul.f32 1.0, %v1082
        %v1084 = vrcp.pop %v990
        %v1085 = vmul.f32 1.0, %v1084
        %v1086 = vrcp.pop %v991
        %v1087 = vmul.f32 1.0, %v1086
        %v1088 = vrcp.pop %v992
        %v1089 = vmul.f32 1.0, %v1088
        %v1090 = vrcp.pop %v993
        %v1091 = vmul.f32 1.0, %v1090
        %v1092 = vrcp.pop %v994
        %v1093 = vmul.f32 1.0, %v1092
        %v1094 = vrcp.pop %v995
        %v1095 = vmul.f32 1.0, %v1094
        %v1096 = vrcp.pop %v996
        %v1097 = vmul.f32 1.0, %v1096
        %v1098 = vrcp.pop %v997
        %v1099 = vmul.f32 1.0, %v1098
        %v1100 = vrcp.pop %v998
        %v1101 = vmul.f32 1.0, %v1100
        %v1102 = vrcp.pop %v999
        %v1103 = vmul.f32 1.0, %v1102
        %v1104 = vrcp.pop %v1000
        %v1105 = vmul.f32 1.0, %v1104
        %v1106 = vrcp.pop %v1001
        %v1107 = vmul.f32 1.0, %v1106
        %v1108 = vrcp.pop %v1002
        %v1109 = vmul.f32 1.0, %v1108
        %v1110 = vrcp.pop %v1003
        %v1111 = vmul.f32 1.0, %v1110
        %v1112 = vrcp.pop %v1004
        %v1113 = vmul.f32 1.0, %v1112
        %v1114 = vrcp.pop %v1005
        %v1115 = vmul.f32 1.0, %v1114
        %v1116 = vrcp.pop %v1006
        %v1117 = vmul.f32 1.0, %v1116
        %v1118 = vrcp.pop %v1007
        %v1119 = vmul.f32 1.0, %v1118
        %v1120 = vrcp.pop %v1008
        %v1121 = vmul.f32 1.0, %v1120
        %v1122 = vrcp.pop %v1009
        %v1123 = vmul.f32 1.0, %v1122
        %v1124 = vrcp.pop %v1010
        %v1125 = vmul.f32 1.0, %v1124
        %v1126 = vrcp.pop %v1011
        %v1127 = vmul.f32 1.0, %v1126
        %v1128 = vrcp.pop %v1012
        %v1129 = vmul.f32 1.0, %v1128
        %v1130 = vrcp.pop %v1013
        %v1131 = vmul.f32 1.0, %v1130
        %v1132 = vrcp.pop %v1014
        %v1133 = vmul.f32 1.0, %v1132
        %v1134 = vrcp.pop %v1015
        %v1135 = vmul.f32 1.0, %v1134
        %v1136 = vrcp.pop %v1016
        %v1137 = vmul.f32 1.0, %v1136
        %v1138 = vrcp.pop %v1017
        %v1139 = vmul.f32 1.0, %v1138
        %v1140 = vrcp.pop %v1018
        %v1141 = vmul.f32 1.0, %v1140
        %v1142 = vrcp.pop %v1019
        %v1143 = vmul.f32 1.0, %v1142
        %v1144 = vrcp.pop %v1020
        %v1145 = vmul.f32 1.0, %v1144
        %v1146 = vrcp.pop %v1021
        %v1147 = vmul.f32 1.0, %v1146
        %v1148 = vrcp.pop %v1022
        %v1149 = vmul.f32 1.0, %v1148
        %v1150 = vrcp.pop %v1023
        %v1151 = vmul.f32 1.0, %v1150
        %v1152 = vmul.f32 %v1025, 1.0614054
        %v1153 = vmul.f32 %v1027, 1.0614054
        %v1154 = vmul.f32 %v1029, 1.0614054
        %v1155 = vmul.f32 %v1031, 1.0614054
        %v1156 = vmul.f32 %v1033, 1.0614054
        %v1157 = vmul.f32 %v1035, 1.0614054
        %v1158 = vmul.f32 %v1037, 1.0614054
        %v1159 = vmul.f32 %v1039, 1.0614054
        %v1160 = vmul.f32 %v1041, 1.0614054
        %v1161 = vmul.f32 %v1043, 1.0614054
        %v1162 = vmul.f32 %v1045, 1.0614054
        %v1163 = vmul.f32 %v1047, 1.0614054
        %v1164 = vmul.f32 %v1049, 1.0614054
        %v1165 = vmul.f32 %v1051, 1.0614054
        %v1166 = vmul.f32 %v1053, 1.0614054
        %v1167 = vmul.f32 %v1055, 1.0614054
        %v1168 = vmul.f32 %v1057, 1.0614054
        %v1169 = vmul.f32 %v1059, 1.0614054
        %v1170 = vmul.f32 %v1061, 1.0614054
        %v1171 = vmul.f32 %v1063, 1.0614054
        %v1172 = vmul.f32 %v1065, 1.0614054
        %v1173 = vmul.f32 %v1067, 1.0614054
        %v1174 = vmul.f32 %v1069, 1.0614054
        %v1175 = vmul.f32 %v1071, 1.0614054
        %v1176 = vmul.f32 %v1073, 1.0614054
        %v1177 = vmul.f32 %v1075, 1.0614054
        %v1178 = vmul.f32 %v1077, 1.0614054
        %v1179 = vmul.f32 %v1079, 1.0614054
        %v1180 = vmul.f32 %v1081, 1.0614054
        %v1181 = vmul.f32 %v1083, 1.0614054
        %v1182 = vmul.f32 %v1085, 1.0614054
        %v1183 = vmul.f32 %v1087, 1.0614054
        %v1184 = vmul.f32 %v1089, 1.0614054
        %v1185 = vmul.f32 %v1091, 1.0614054
        %v1186 = vmul.f32 %v1093, 1.0614054
        %v1187 = vmul.f32 %v1095, 1.0614054
        %v1188 = vmul.f32 %v1097, 1.0614054
        %v1189 = vmul.f32 %v1099, 1.0614054
        %v1190 = vmul.f32 %v1101, 1.0614054
        %v1191 = vmul.f32 %v1103, 1.0614054
        %v1192 = vmul.f32 %v1105, 1.0614054
        %v1193 = vmul.f32 %v1107, 1.0614054
        %v1194 = vmul.f32 %v1109, 1.0614054
        %v1195 = vmul.f32 %v1111, 1.0614054
        %v1196 = vmul.f32 %v1113, 1.0614054
        %v1197 = vmul.f32 %v1115, 1.0614054
        %v1198 = vmul.f32 %v1117, 1.0614054
        %v1199 = vmul.f32 %v1119, 1.0614054
        %v1200 = vmul.f32 %v1121, 1.0614054
        %v1201 = vmul.f32 %v1123, 1.0614054
        %v1202 = vmul.f32 %v1125, 1.0614054
        %v1203 = vmul.f32 %v1127, 1.0614054
        %v1204 = vmul.f32 %v1129, 1.0614054
        %v1205 = vmul.f32 %v1131, 1.0614054
        %v1206 = vmul.f32 %v1133, 1.0614054
        %v1207 = vmul.f32 %v1135, 1.0614054
        %v1208 = vmul.f32 %v1137, 1.0614054
        %v1209 = vmul.f32 %v1139, 1.0614054
        %v1210 = vmul.f32 %v1141, 1.0614054
        %v1211 = vmul.f32 %v1143, 1.0614054
        %v1212 = vmul.f32 %v1145, 1.0614054
        %v1213 = vmul.f32 %v1147, 1.0614054
        %v1214 = vmul.f32 %v1149, 1.0614054
        %v1215 = vmul.f32 %v1151, 1.0614054
        %v1216 = vadd.f32 %v1152, -1.4531521
        %v1217 = vadd.f32 %v1153, -1.4531521
        %v1218 = vadd.f32 %v1154, -1.4531521
        %v1219 = vadd.f32 %v1155, -1.4531521
        %v1220 = vadd.f32 %v1156, -1.4531521
        %v1221 = vadd.f32 %v1157, -1.4531521
        %v1222 = vadd.f32 %v1158, -1.4531521
        %v1223 = vadd.f32 %v1159, -1.4531521
        %v1224 = vadd.f32 %v1160, -1.4531521
        %v1225 = vadd.f32 %v1161, -1.4531521
        %v1226 = vadd.f32 %v1162, -1.4531521
        %v1227 = vadd.f32 %v1163, -1.4531521
        %v1228 = vadd.f32 %v1164, -1.4531521
        %v1229 = vadd.f32 %v1165, -1.4531521
        %v1230 = vadd.f32 %v1166, -1.4531521
        %v1231 = vadd.f32 %v1167, -1.4531521
        %v1232 = vadd.f32 %v1168, -1.4531521
        %v1233 = vadd.f32 %v1169, -1.4531521
        %v1234 = vadd.f32 %v1170, -1.4531521
        %v1235 = vadd.f32 %v1171, -1.4531521
        %v1236 = vadd.f32 %v1172, -1.4531521
        %v1237 = vadd.f32 %v1173, -1.4531521
        %v1238 = vadd.f32 %v1174, -1.4531521
        %v1239 = vadd.f32 %v1175, -1.4531521
        %v1240 = vadd.f32 %v1176, -1.4531521
        %v1241 = vadd.f32 %v1177, -1.4531521
        %v1242 = vadd.f32 %v1178, -1.4531521
        %v1243 = vadd.f32 %v1179, -1.4531521
        %v1244 = vadd.f32 %v1180, -1.4531521
        %v1245 = vadd.f32 %v1181, -1.4531521
        %v1246 = vadd.f32 %v1182, -1.4531521
        %v1247 = vadd.f32 %v1183, -1.4531521
        %v1248 = vadd.f32 %v1184, -1.4531521
        %v1249 = vadd.f32 %v1185, -1.4531521
        %v1250 = vadd.f32 %v1186, -1.4531521
        %v1251 = vadd.f32 %v1187, -1.4531521
        %v1252 = vadd.f32 %v1188, -1.4531521
        %v1253 = vadd.f32 %v1189, -1.4531521
        %v1254 = vadd.f32 %v1190, -1.4531521
        %v1255 = vadd.f32 %v1191, -1.4531521
        %v1256 = vadd.f32 %v1192, -1.4531521
        %v1257 = vadd.f32 %v1193, -1.4531521
        %v1258 = vadd.f32 %v1194, -1.4531521
        %v1259 = vadd.f32 %v1195, -1.4531521
        %v1260 = vadd.f32 %v1196, -1.4531521
        %v1261 = vadd.f32 %v1197, -1.4531521
        %v1262 = vadd.f32 %v1198, -1.4531521
        %v1263 = vadd.f32 %v1199, -1.4531521
        %v1264 = vadd.f32 %v1200, -1.4531521
        %v1265 = vadd.f32 %v1201, -1.4531521
        %v1266 = vadd.f32 %v1202, -1.4531521
        %v1267 = vadd.f32 %v1203, -1.4531521
        %v1268 = vadd.f32 %v1204, -1.4531521
        %v1269 = vadd.f32 %v1205, -1.4531521
        %v1270 = vadd.f32 %v1206, -1.4531521
        %v1271 = vadd.f32 %v1207, -1.4531521
        %v1272 = vadd.f32 %v1208, -1.4531521
        %v1273 = vadd.f32 %v1209, -1.4531521
        %v1274 = vadd.f32 %v1210, -1.4531521
        %v1275 = vadd.f32 %v1211, -1.4531521
        %v1276 = vadd.f32 %v1212, -1.4531521
        %v1277 = vadd.f32 %v1213, -1.4531521
        %v1278 = vadd.f32 %v1214, -1.4531521
        %v1279 = vadd.f32 %v1215, -1.4531521
        %v1280 = vmul.f32 %v1216, %v1025
        %v1281 = vmul.f32 %v1217, %v1027
        %v1282 = vmul.f32 %v1218, %v1029
        %v1283 = vmul.f32 %v1219, %v1031
        %v1284 = vmul.f32 %v1220, %v1033
        %v1285 = vmul.f32 %v1221, %v1035
        %v1286 = vmul.f32 %v1222, %v1037
        %v1287 = vmul.f32 %v1223, %v1039
        %v1288 = vmul.f32 %v1224, %v1041
        %v1289 = vmul.f32 %v1225, %v1043
        %v1290 = vmul.f32 %v1226, %v1045
        %v1291 = vmul.f32 %v1227, %v1047
        %v1292 = vmul.f32 %v1228, %v1049
        %v1293 = vmul.f32 %v1229, %v1051
        %v1294 = vmul.f32 %v1230, %v1053
        %v1295 = vmul.f32 %v1231, %v1055
        %v1296 = vmul.f32 %v1232, %v1057
        %v1297 = vmul.f32 %v1233, %v1059
        %v1298 = vmul.f32 %v1234, %v1061
        %v1299 = vmul.f32 %v1235, %v1063
        %v1300 = vmul.f32 %v1236, %v1065
        %v1301 = vmul.f32 %v1237, %v1067
        %v1302 = vmul.f32 %v1238, %v1069
        %v1303 = vmul.f32 %v1239, %v1071
        %v1304 = vmul.f32 %v1240, %v1073
        %v1305 = vmul.f32 %v1241, %v1075
        %v1306 = vmul.f32 %v1242, %v1077
        %v1307 = vmul.f32 %v1243, %v1079
        %v1308 = vmul.f32 %v1244, %v1081
        %v1309 = vmul.f32 %v1245, %v1083
        %v1310 = vmul.f32 %v1246, %v1085
        %v1311 = vmul.f32 %v1247, %v1087
        %v1312 = vmul.f32 %v1248, %v1089
        %v1313 = vmul.f32 %v1249, %v1091
        %v1314 = vmul.f32 %v1250, %v1093
        %v1315 = vmul.f32 %v1251, %v1095
        %v1316 = vmul.f32 %v1252, %v1097
        %v1317 = vmul.f32 %v1253, %v1099
        %v1318 = vmul.f32 %v1254, %v1101
        %v1319 = vmul.f32 %v1255, %v1103
        %v1320 = vmul.f32 %v1256, %v1105
        %v1321 = vmul.f32 %v1257, %v1107
        %v1322 = vmul.f32 %v1258, %v1109
        %v1323 = vmul.f32 %v1259, %v1111
        %v1324 = vmul.f32 %v1260, %v1113
        %v1325 = vmul.f32 %v1261, %v1115
        %v1326 = vmul.f32 %v1262, %v1117
        %v1327 = vmul.f32 %v1263, %v1119
        %v1328 = vmul.f32 %v1264, %v1121
        %v1329 = vmul.f32 %v1265, %v1123
        %v1330 = vmul.f32 %v1266, %v1125
        %v1331 = vmul.f32 %v1267, %v1127
        %v1332 = vmul.f32 %v1268, %v1129
        %v1333 = vmul.f32 %v1269, %v1131
        %v1334 = vmul.f32 %v1270, %v1133
        %v1335 = vmul.f32 %v1271, %v1135
        %v1336 = vmul.f32 %v1272, %v1137
        %v1337 = vmul.f32 %v1273, %v1139
        %v1338 = vmul.f32 %v1274, %v1141
        %v1339 = vmul.f32 %v1275, %v1143
        %v1340 = vmul.f32 %v1276, %v1145
        %v1341 = vmul.f32 %v1277, %v1147
        %v1342 = vmul.f32 %v1278, %v1149
        %v1343 = vmul.f32 %v1279, %v1151
        %v1344 = vadd.f32 %v1280, 1.4214138
        %v1345 = vadd.f32 %v1281, 1.4214138
        %v1346 = vadd.f32 %v1282, 1.4214138
        %v1347 = vadd.f32 %v1283, 1.4214138
        %v1348 = vadd.f32 %v1284, 1.4214138
        %v1349 = vadd.f32 %v1285, 1.4214138
        %v1350 = vadd.f32 %v1286, 1.4214138
        %v1351 = vadd.f32 %v1287, 1.4214138
        %v1352 = vadd.f32 %v1288, 1.4214138
        %v1353 = vadd.f32 %v1289, 1.4214138
        %v1354 = vadd.f32 %v1290, 1.4214138
        %v1355 = vadd.f32 %v1291, 1.4214138
        %v1356 = vadd.f32 %v1292, 1.4214138
        %v1357 = vadd.f32 %v1293, 1.4214138
        %v1358 = vadd.f32 %v1294, 1.4214138
        %v1359 = vadd.f32 %v1295, 1.4214138
        %v1360 = vadd.f32 %v1296, 1.4214138
        %v1361 = vadd.f32 %v1297, 1.4214138
        %v1362 = vadd.f32 %v1298, 1.4214138
        %v1363 = vadd.f32 %v1299, 1.4214138
        %v1364 = vadd.f32 %v1300, 1.4214138
        %v1365 = vadd.f32 %v1301, 1.4214138
        %v1366 = vadd.f32 %v1302, 1.4214138
        %v1367 = vadd.f32 %v1303, 1.4214138
        %v1368 = vadd.f32 %v1304, 1.4214138
        %v1369 = vadd.f32 %v1305, 1.4214138
        %v1370 = vadd.f32 %v1306, 1.4214138
        %v1371 = vadd.f32 %v1307, 1.4214138
        %v1372 = vadd.f32 %v1308, 1.4214138
        %v1373 = vadd.f32 %v1309, 1.4214138
        %v1374 = vadd.f32 %v1310, 1.4214138
        %v1375 = vadd.f32 %v1311, 1.4214138
        %v1376 = vadd.f32 %v1312, 1.4214138
        %v1377 = vadd.f32 %v1313, 1.4214138
        %v1378 = vadd.f32 %v1314, 1.4214138
        %v1379 = vadd.f32 %v1315, 1.4214138
        %v1380 = vadd.f32 %v1316, 1.4214138
        %v1381 = vadd.f32 %v1317, 1.4214138
        %v1382 = vadd.f32 %v1318, 1.4214138
        %v1383 = vadd.f32 %v1319, 1.4214138
        %v1384 = vadd.f32 %v1320, 1.4214138
        %v1385 = vadd.f32 %v1321, 1.4214138
        %v1386 = vadd.f32 %v1322, 1.4214138
        %v1387 = vadd.f32 %v1323, 1.4214138
        %v1388 = vadd.f32 %v1324, 1.4214138
        %v1389 = vadd.f32 %v1325, 1.4214138
        %v1390 = vadd.f32 %v1326, 1.4214138
        %v1391 = vadd.f32 %v1327, 1.4214138
        %v1392 = vadd.f32 %v1328, 1.4214138
        %v1393 = vadd.f32 %v1329, 1.4214138
        %v1394 = vadd.f32 %v1330, 1.4214138
        %v1395 = vadd.f32 %v1331, 1.4214138
        %v1396 = vadd.f32 %v1332, 1.4214138
        %v1397 = vadd.f32 %v1333, 1.4214138
        %v1398 = vadd.f32 %v1334, 1.4214138
        %v1399 = vadd.f32 %v1335, 1.4214138
        %v1400 = vadd.f32 %v1336, 1.4214138
        %v1401 = vadd.f32 %v1337, 1.4214138
        %v1402 = vadd.f32 %v1338, 1.4214138
        %v1403 = vadd.f32 %v1339, 1.4214138
        %v1404 = vadd.f32 %v1340, 1.4214138
        %v1405 = vadd.f32 %v1341, 1.4214138
        %v1406 = vadd.f32 %v1342, 1.4214138
        %v1407 = vadd.f32 %v1343, 1.4214138
        %v1408 = vmul.f32 %v1344, %v1025
        %v1409 = vmul.f32 %v1345, %v1027
        %v1410 = vmul.f32 %v1346, %v1029
        %v1411 = vmul.f32 %v1347, %v1031
        %v1412 = vmul.f32 %v1348, %v1033
        %v1413 = vmul.f32 %v1349, %v1035
        %v1414 = vmul.f32 %v1350, %v1037
        %v1415 = vmul.f32 %v1351, %v1039
        %v1416 = vmul.f32 %v1352, %v1041
        %v1417 = vmul.f32 %v1353, %v1043
        %v1418 = vmul.f32 %v1354, %v1045
        %v1419 = vmul.f32 %v1355, %v1047
        %v1420 = vmul.f32 %v1356, %v1049
        %v1421 = vmul.f32 %v1357, %v1051
        %v1422 = vmul.f32 %v1358, %v1053
        %v1423 = vmul.f32 %v1359, %v1055
        %v1424 = vmul.f32 %v1360, %v1057
        %v1425 = vmul.f32 %v1361, %v1059
        %v1426 = vmul.f32 %v1362, %v1061
        %v1427 = vmul.f32 %v1363, %v1063
        %v1428 = vmul.f32 %v1364, %v1065
        %v1429 = vmul.f32 %v1365, %v1067
        %v1430 = vmul.f32 %v1366, %v1069
        %v1431 = vmul.f32 %v1367, %v1071
        %v1432 = vmul.f32 %v1368, %v1073
        %v1433 = vmul.f32 %v1369, %v1075
        %v1434 = vmul.f32 %v1370, %v1077
        %v1435 = vmul.f32 %v1371, %v1079
        %v1436 = vmul.f32 %v1372, %v1081
        %v1437 = vmul.f32 %v1373, %v1083
        %v1438 = vmul.f32 %v1374, %v1085
        %v1439 = vmul.f32 %v1375, %v1087
        %v1440 = vmul.f32 %v1376, %v1089
        %v1441 = vmul.f32 %v1377, %v1091
        %v1442 = vmul.f32 %v1378, %v1093
        %v1443 = vmul.f32 %v1379, %v1095
        %v1444 = vmul.f32 %v1380, %v1097
        %v1445 = vmul.f32 %v1381, %v1099
        %v1446 = vmul.f32 %v1382, %v1101
        %v1447 = vmul.f32 %v1383, %v1103
        %v1448 = vmul.f32 %v1384, %v1105
        %v1449 = vmul.f32 %v1385, %v1107
        %v1450 = vmul.f32 %v1386, %v1109
        %v1451 = vmul.f32 %v1387, %v1111
        %v1452 = vmul.f32 %v1388, %v1113
        %v1453 = vmul.f32 %v1389, %v1115
        %v1454 = vmul.f32 %v1390, %v1117
        %v1455 = vmul.f32 %v1391, %v1119
        %v1456 = vmul.f32 %v1392, %v1121
        %v1457 = vmul.f32 %v1393, %v1123
        %v1458 = vmul.f32 %v1394, %v1125
        %v1459 = vmul.f32 %v1395, %v1127
        %v1460 = vmul.f32 %v1396, %v1129
        %v1461 = vmul.f32 %v1397, %v1131
        %v1462 = vmul.f32 %v1398, %v1133
        %v1463 = vmul.f32 %v1399, %v1135
        %v1464 = vmul.f32 %v1400, %v1137
        %v1465 = vmul.f32 %v1401, %v1139
        %v1466 = vmul.f32 %v1402, %v1141
        %v1467 = vmul.f32 %v1403, %v1143
        %v1468 = vmul.f32 %v1404, %v1145
        %v1469 = vmul.f32 %v1405, %v1147
        %v1470 = vmul.f32 %v1406, %v1149
        %v1471 = vmul.f32 %v1407, %v1151
        %v1472 = vadd.f32 %v1408, -0.28449672
        %v1473 = vadd.f32 %v1409, -0.28449672
        %v1474 = vadd.f32 %v1410, -0.28449672
        %v1475 = vadd.f32 %v1411, -0.28449672
        %v1476 = vadd.f32 %v1412, -0.28449672
        %v1477 = vadd.f32 %v1413, -0.28449672
        %v1478 = vadd.f32 %v1414, -0.28449672
        %v1479 = vadd.f32 %v1415, -0.28449672
        %v1480 = vadd.f32 %v1416, -0.28449672
        %v1481 = vadd.f32 %v1417, -0.28449672
        %v1482 = vadd.f32 %v1418, -0.28449672
        %v1483 = vadd.f32 %v1419, -0.28449672
        %v1484 = vadd.f32 %v1420, -0.28449672
        %v1485 = vadd.f32 %v1421, -0.28449672
        %v1486 = vadd.f32 %v1422, -0.28449672
        %v1487 = vadd.f32 %v1423, -0.28449672
        %v1488 = vadd.f32 %v1424, -0.28449672
        %v1489 = vadd.f32 %v1425, -0.28449672
        %v1490 = vadd.f32 %v1426, -0.28449672
        %v1491 = vadd.f32 %v1427, -0.28449672
        %v1492 = vadd.f32 %v1428, -0.28449672
        %v1493 = vadd.f32 %v1429, -0.28449672
        %v1494 = vadd.f32 %v1430, -0.28449672
        %v1495 = vadd.f32 %v1431, -0.28449672
        %v1496 = vadd.f32 %v1432, -0.28449672
        %v1497 = vadd.f32 %v1433, -0.28449672
        %v1498 = vadd.f32 %v1434, -0.28449672
        %v1499 = vadd.f32 %v1435, -0.28449672
        %v1500 = vadd.f32 %v1436, -0.28449672
        %v1501 = vadd.f32 %v1437, -0.28449672
        %v1502 = vadd.f32 %v1438, -0.28449672
        %v1503 = vadd.f32 %v1439, -0.28449672
        %v1504 = vadd.f32 %v1440, -0.28449672
        %v1505 = vadd.f32 %v1441, -0.28449672
        %v1506 = vadd.f32 %v1442, -0.28449672
        %v1507 = vadd.f32 %v1443, -0.28449672
        %v1508 = vadd.f32 %v1444, -0.28449672
        %v1509 = vadd.f32 %v1445, -0.28449672
        %v1510 = vadd.f32 %v1446, -0.28449672
        %v1511 = vadd.f32 %v1447, -0.28449672
        %v1512 = vadd.f32 %v1448, -0.28449672
        %v1513 = vadd.f32 %v1449, -0.28449672
        %v1514 = vadd.f32 %v1450, -0.28449672
        %v1515 = vadd.f32 %v1451, -0.28449672
        %v1516 = vadd.f32 %v1452, -0.28449672
        %v1517 = vadd.f32 %v1453, -0.28449672
        %v1518 = vadd.f32 %v1454, -0.28449672
        %v1519 = vadd.f32 %v1455, -0.28449672
        %v1520 = vadd.f32 %v1456, -0.28449672
        %v1521 = vadd.f32 %v1457, -0.28449672
        %v1522 = vadd.f32 %v1458, -0.28449672
        %v1523 = vadd.f32 %v1459, -0.28449672
        %v1524 = vadd.f32 %v1460, -0.28449672
        %v1525 = vadd.f32 %v1461, -0.28449672
        %v1526 = vadd.f32 %v1462, -0.28449672
        %v1527 = vadd.f32 %v1463, -0.28449672
        %v1528 = vadd.f32 %v1464, -0.28449672
        %v1529 = vadd.f32 %v1465, -0.28449672
        %v1530 = vadd.f32 %v1466, -0.28449672
        %v1531 = vadd.f32 %v1467, -0.28449672
        %v1532 = vadd.f32 %v1468, -0.28449672
        %v1533 = vadd.f32 %v1469, -0.28449672
        %v1534 = vadd.f32 %v1470, -0.28449672
        %v1535 = vadd.f32 %v1471, -0.28449672
        %v1536 = vmul.f32 %v1472, %v1025
        %v1537 = vmul.f32 %v1473, %v1027
        %v1538 = vmul.f32 %v1474, %v1029
        %v1539 = vmul.f32 %v1475, %v1031
        %v1540 = vmul.f32 %v1476, %v1033
        %v1541 = vmul.f32 %v1477, %v1035
        %v1542 = vmul.f32 %v1478, %v1037
        %v1543 = vmul.f32 %v1479, %v1039
        %v1544 = vmul.f32 %v1480, %v1041
        %v1545 = vmul.f32 %v1481, %v1043
        %v1546 = vmul.f32 %v1482, %v1045
        %v1547 = vmul.f32 %v1483, %v1047
        %v1548 = vmul.f32 %v1484, %v1049
        %v1549 = vmul.f32 %v1485, %v1051
        %v1550 = vmul.f32 %v1486, %v1053
        %v1551 = vmul.f32 %v1487, %v1055
        %v1552 = vmul.f32 %v1488, %v1057
        %v1553 = vmul.f32 %v1489, %v1059
        %v1554 = vmul.f32 %v1490, %v1061
        %v1555 = vmul.f32 %v1491, %v1063
        %v1556 = vmul.f32 %v1492, %v1065
        %v1557 = vmul.f32 %v1493, %v1067
        %v1558 = vmul.f32 %v1494, %v1069
        %v1559 = vmul.f32 %v1495, %v1071
        %v1560 = vmul.f32 %v1496, %v1073
        %v1561 = vmul.f32 %v1497, %v1075
        %v1562 = vmul.f32 %v1498, %v1077
        %v1563 = vmul.f32 %v1499, %v1079
        %v1564 = vmul.f32 %v1500, %v1081
        %v1565 = vmul.f32 %v1501, %v1083
        %v1566 = vmul.f32 %v1502, %v1085
        %v1567 = vmul.f32 %v1503, %v1087
        %v1568 = vmul.f32 %v1504, %v1089
        %v1569 = vmul.f32 %v1505, %v1091
        %v1570 = vmul.f32 %v1506, %v1093
        %v1571 = vmul.f32 %v1507, %v1095
        %v1572 = vmul.f32 %v1508, %v1097
        %v1573 = vmul.f32 %v1509, %v1099
        %v1574 = vmul.f32 %v1510, %v1101
        %v1575 = vmul.f32 %v1511, %v1103
        %v1576 = vmul.f32 %v1512, %v1105
        %v1577 = vmul.f32 %v1513, %v1107
        %v1578 = vmul.f32 %v1514, %v1109
        %v1579 = vmul.f32 %v1515, %v1111
        %v1580 = vmul.f32 %v1516, %v1113
        %v1581 = vmul.f32 %v1517, %v1115
        %v1582 = vmul.f32 %v1518, %v1117
        %v1583 = vmul.f32 %v1519, %v1119
        %v1584 = vmul.f32 %v1520, %v1121
        %v1585 = vmul.f32 %v1521, %v1123
        %v1586 = vmul.f32 %v1522, %v1125
        %v1587 = vmul.f32 %v1523, %v1127
        %v1588 = vmul.f32 %v1524, %v1129
        %v1589 = vmul.f32 %v1525, %v1131
        %v1590 = vmul.f32 %v1526, %v1133
        %v1591 = vmul.f32 %v1527, %v1135
        %v1592 = vmul.f32 %v1528, %v1137
        %v1593 = vmul.f32 %v1529, %v1139
        %v1594 = vmul.f32 %v1530, %v1141
        %v1595 = vmul.f32 %v1531, %v1143
        %v1596 = vmul.f32 %v1532, %v1145
        %v1597 = vmul.f32 %v1533, %v1147
        %v1598 = vmul.f32 %v1534, %v1149
        %v1599 = vmul.f32 %v1535, %v1151
        %v1600 = vadd.f32 %v1536, 0.2548296
        %v1601 = vadd.f32 %v1537, 0.2548296
        %v1602 = vadd.f32 %v1538, 0.2548296
        %v1603 = vadd.f32 %v1539, 0.2548296
        %v1604 = vadd.f32 %v1540, 0.2548296
        %v1605 = vadd.f32 %v1541, 0.2548296
        %v1606 = vadd.f32 %v1542, 0.2548296
        %v1607 = vadd.f32 %v1543, 0.2548296
        %v1608 = vadd.f32 %v1544, 0.2548296
        %v1609 = vadd.f32 %v1545, 0.2548296
        %v1610 = vadd.f32 %v1546, 0.2548296
        %v1611 = vadd.f32 %v1547, 0.2548296
        %v1612 = vadd.f32 %v1548, 0.2548296
        %v1613 = vadd.f32 %v1549, 0.2548296
        %v1614 = vadd.f32 %v1550, 0.2548296
        %v1615 = vadd.f32 %v1551, 0.2548296
        %v1616 = vadd.f32 %v1552, 0.2548296
        %v1617 = vadd.f32 %v1553, 0.2548296
        %v1618 = vadd.f32 %v1554, 0.2548296
        %v1619 = vadd.f32 %v1555, 0.2548296
        %v1620 = vadd.f32 %v1556, 0.2548296
        %v1621 = vadd.f32 %v1557, 0.2548296
        %v1622 = vadd.f32 %v1558, 0.2548296
        %v1623 = vadd.f32 %v1559, 0.2548296
        %v1624 = vadd.f32 %v1560, 0.2548296
        %v1625 = vadd.f32 %v1561, 0.2548296
        %v1626 = vadd.f32 %v1562, 0.2548296
        %v1627 = vadd.f32 %v1563, 0.2548296
        %v1628 = vadd.f32 %v1564, 0.2548296
        %v1629 = vadd.f32 %v1565, 0.2548296
        %v1630 = vadd.f32 %v1566, 0.2548296
        %v1631 = vadd.f32 %v1567, 0.2548296
        %v1632 = vadd.f32 %v1568, 0.2548296
        %v1633 = vadd.f32 %v1569, 0.2548296
        %v1634 = vadd.f32 %v1570, 0.2548296
        %v1635 = vadd.f32 %v1571, 0.2548296
        %v1636 = vadd.f32 %v1572, 0.2548296
        %v1637 = vadd.f32 %v1573, 0.2548296
        %v1638 = vadd.f32 %v1574, 0.2548296
        %v1639 = vadd.f32 %v1575, 0.2548296
        %v1640 = vadd.f32 %v1576, 0.2548296
        %v1641 = vadd.f32 %v1577, 0.2548296
        %v1642 = vadd.f32 %v1578, 0.2548296
        %v1643 = vadd.f32 %v1579, 0.2548296
        %v1644 = vadd.f32 %v1580, 0.2548296
        %v1645 = vadd.f32 %v1581, 0.2548296
        %v1646 = vadd.f32 %v1582, 0.2548296
        %v1647 = vadd.f32 %v1583, 0.2548296
        %v1648 = vadd.f32 %v1584, 0.2548296
        %v1649 = vadd.f32 %v1585, 0.2548296
        %v1650 = vadd.f32 %v1586, 0.2548296
        %v1651 = vadd.f32 %v1587, 0.2548296
        %v1652 = vadd.f32 %v1588, 0.2548296
        %v1653 = vadd.f32 %v1589, 0.2548296
        %v1654 = vadd.f32 %v1590, 0.2548296
        %v1655 = vadd.f32 %v1591, 0.2548296
        %v1656 = vadd.f32 %v1592, 0.2548296
        %v1657 = vadd.f32 %v1593, 0.2548296
        %v1658 = vadd.f32 %v1594, 0.2548296
        %v1659 = vadd.f32 %v1595, 0.2548296
        %v1660 = vadd.f32 %v1596, 0.2548296
        %v1661 = vadd.f32 %v1597, 0.2548296
        %v1662 = vadd.f32 %v1598, 0.2548296
        %v1663 = vadd.f32 %v1599, 0.2548296
        %v1664 = vmul.f32 %v1600, %v1025
        %v1665 = vmul.f32 %v1601, %v1027
        %v1666 = vmul.f32 %v1602, %v1029
        %v1667 = vmul.f32 %v1603, %v1031
        %v1668 = vmul.f32 %v1604, %v1033
        %v1669 = vmul.f32 %v1605, %v1035
        %v1670 = vmul.f32 %v1606, %v1037
        %v1671 = vmul.f32 %v1607, %v1039
        %v1672 = vmul.f32 %v1608, %v1041
        %v1673 = vmul.f32 %v1609, %v1043
        %v1674 = vmul.f32 %v1610, %v1045
        %v1675 = vmul.f32 %v1611, %v1047
        %v1676 = vmul.f32 %v1612, %v1049
        %v1677 = vmul.f32 %v1613, %v1051
        %v1678 = vmul.f32 %v1614, %v1053
        %v1679 = vmul.f32 %v1615, %v1055
        %v1680 = vmul.f32 %v1616, %v1057
        %v1681 = vmul.f32 %v1617, %v1059
        %v1682 = vmul.f32 %v1618, %v1061
        %v1683 = vmul.f32 %v1619, %v1063
        %v1684 = vmul.f32 %v1620, %v1065
        %v1685 = vmul.f32 %v1621, %v1067
        %v1686 = vmul.f32 %v1622, %v1069
        %v1687 = vmul.f32 %v1623, %v1071
        %v1688 = vmul.f32 %v1624, %v1073
        %v1689 = vmul.f32 %v1625, %v1075
        %v1690 = vmul.f32 %v1626, %v1077
        %v1691 = vmul.f32 %v1627, %v1079
        %v1692 = vmul.f32 %v1628, %v1081
        %v1693 = vmul.f32 %v1629, %v1083
        %v1694 = vmul.f32 %v1630, %v1085
        %v1695 = vmul.f32 %v1631, %v1087
        %v1696 = vmul.f32 %v1632, %v1089
        %v1697 = vmul.f32 %v1633, %v1091
        %v1698 = vmul.f32 %v1634, %v1093
        %v1699 = vmul.f32 %v1635, %v1095
        %v1700 = vmul.f32 %v1636, %v1097
        %v1701 = vmul.f32 %v1637, %v1099
        %v1702 = vmul.f32 %v1638, %v1101
        %v1703 = vmul.f32 %v1639, %v1103
        %v1704 = vmul.f32 %v1640, %v1105
        %v1705 = vmul.f32 %v1641, %v1107
        %v1706 = vmul.f32 %v1642, %v1109
        %v1707 = vmul.f32 %v1643, %v1111
        %v1708 = vmul.f32 %v1644, %v1113
        %v1709 = vmul.f32 %v1645, %v1115
        %v1710 = vmul.f32 %v1646, %v1117
        %v1711 = vmul.f32 %v1647, %v1119
        %v1712 = vmul.f32 %v1648, %v1121
        %v1713 = vmul.f32 %v1649, %v1123
        %v1714 = vmul.f32 %v1650, %v1125
        %v1715 = vmul.f32 %v1651, %v1127
        %v1716 = vmul.f32 %v1652, %v1129
        %v1717 = vmul.f32 %v1653, %v1131
        %v1718 = vmul.f32 %v1654, %v1133
        %v1719 = vmul.f32 %v1655, %v1135
        %v1720 = vmul.f32 %v1656, %v1137
        %v1721 = vmul.f32 %v1657, %v1139
        %v1722 = vmul.f32 %v1658, %v1141
        %v1723 = vmul.f32 %v1659, %v1143
        %v1724 = vmul.f32 %v1660, %v1145
        %v1725 = vmul.f32 %v1661, %v1147
        %v1726 = vmul.f32 %v1662, %v1149
        %v1727 = vmul.f32 %v1663, %v1151
        %v1728 = vsub.f32 0.0, %v832
        %v1729 = vsub.f32 0.0, %v833
        %v1730 = vsub.f32 0.0, %v834
        %v1731 = vsub.f32 0.0, %v835
        %v1732 = vsub.f32 0.0, %v836
        %v1733 = vsub.f32 0.0, %v837
        %v1734 = vsub.f32 0.0, %v838
        %v1735 = vsub.f32 0.0, %v839
        %v1736 = vsub.f32 0.0, %v840
        %v1737 = vsub.f32 0.0, %v841
        %v1738 = vsub.f32 0.0, %v842
        %v1739 = vsub.f32 0.0, %v843
        %v1740 = vsub.f32 0.0, %v844
        %v1741 = vsub.f32 0.0, %v845
        %v1742 = vsub.f32 0.0, %v846
        %v1743 = vsub.f32 0.0, %v847
        %v1744 = vsub.f32 0.0, %v848
        %v1745 = vsub.f32 0.0, %v849
        %v1746 = vsub.f32 0.0, %v850
        %v1747 = vsub.f32 0.0, %v851
        %v1748 = vsub.f32 0.0, %v852
        %v1749 = vsub.f32 0.0, %v853
        %v1750 = vsub.f32 0.0, %v854
        %v1751 = vsub.f32 0.0, %v855
        %v1752 = vsub.f32 0.0, %v856
        %v1753 = vsub.f32 0.0, %v857
        %v1754 = vsub.f32 0.0, %v858
        %v1755 = vsub.f32 0.0, %v859
        %v1756 = vsub.f32 0.0, %v860
        %v1757 = vsub.f32 0.0, %v861
        %v1758 = vsub.f32 0.0, %v862
        %v1759 = vsub.f32 0.0, %v863
        %v1760 = vsub.f32 0.0, %v864
        %v1761 = vsub.f32 0.0, %v865
        %v1762 = vsub.f32 0.0, %v866
        %v1763 = vsub.f32 0.0, %v867
        %v1764 = vsub.f32 0.0, %v868
        %v1765 = vsub.f32 0.0, %v869
        %v1766 = vsub.f32 0.0, %v870
        %v1767 = vsub.f32 0.0, %v871
        %v1768 = vsub.f32 0.0, %v872
        %v1769 = vsub.f32 0.0, %v873
        %v1770 = vsub.f32 0.0, %v874
        %v1771 = vsub.f32 0.0, %v875
        %v1772 = vsub.f32 0.0, %v876
        %v1773 = vsub.f32 0.0, %v877
        %v1774 = vsub.f32 0.0, %v878
        %v1775 = vsub.f32 0.0, %v879
        %v1776 = vsub.f32 0.0, %v880
        %v1777 = vsub.f32 0.0, %v881
        %v1778 = vsub.f32 0.0, %v882
        %v1779 = vsub.f32 0.0, %v883
        %v1780 = vsub.f32 0.0, %v884
        %v1781 = vsub.f32 0.0, %v885
        %v1782 = vsub.f32 0.0, %v886
        %v1783 = vsub.f32 0.0, %v887
        %v1784 = vsub.f32 0.0, %v888
        %v1785 = vsub.f32 0.0, %v889
        %v1786 = vsub.f32 0.0, %v890
        %v1787 = vsub.f32 0.0, %v891
        %v1788 = vsub.f32 0.0, %v892
        %v1789 = vsub.f32 0.0, %v893
        %v1790 = vsub.f32 0.0, %v894
        %v1791 = vsub.f32 0.0, %v895
        %v1792 = vmul.f32 %v1728, %v832
        %v1793 = vmul.f32 %v1729, %v833
        %v1794 = vmul.f32 %v1730, %v834
        %v1795 = vmul.f32 %v1731, %v835
        %v1796 = vmul.f32 %v1732, %v836
        %v1797 = vmul.f32 %v1733, %v837
        %v1798 = vmul.f32 %v1734, %v838
        %v1799 = vmul.f32 %v1735, %v839
        %v1800 = vmul.f32 %v1736, %v840
        %v1801 = vmul.f32 %v1737, %v841
        %v1802 = vmul.f32 %v1738, %v842
        %v1803 = vmul.f32 %v1739, %v843
        %v1804 = vmul.f32 %v1740, %v844
        %v1805 = vmul.f32 %v1741, %v845
        %v1806 = vmul.f32 %v1742, %v846
        %v1807 = vmul.f32 %v1743, %v847
        %v1808 = vmul.f32 %v1744, %v848
        %v1809 = vmul.f32 %v1745, %v849
        %v1810 = vmul.f32 %v1746, %v850
        %v1811 = vmul.f32 %v1747, %v851
        %v1812 = vmul.f32 %v1748, %v852
        %v1813 = vmul.f32 %v1749, %v853
        %v1814 = vmul.f32 %v1750, %v854
        %v1815 = vmul.f32 %v1751, %v855
        %v1816 = vmul.f32 %v1752, %v856
        %v1817 = vmul.f32 %v1753, %v857
        %v1818 = vmul.f32 %v1754, %v858
        %v1819 = vmul.f32 %v1755, %v859
        %v1820 = vmul.f32 %v1756, %v860
        %v1821 = vmul.f32 %v1757, %v861
        %v1822 = vmul.f32 %v1758, %v862
        %v1823 = vmul.f32 %v1759, %v863
        %v1824 = vmul.f32 %v1760, %v864
        %v1825 = vmul.f32 %v1761, %v865
        %v1826 = vmul.f32 %v1762, %v866
        %v1827 = vmul.f32 %v1763, %v867
        %v1828 = vmul.f32 %v1764, %v868
        %v1829 = vmul.f32 %v1765, %v869
        %v1830 = vmul.f32 %v1766, %v870
        %v1831 = vmul.f32 %v1767, %v871
        %v1832 = vmul.f32 %v1768, %v872
        %v1833 = vmul.f32 %v1769, %v873
        %v1834 = vmul.f32 %v1770, %v874
        %v1835 = vmul.f32 %v1771, %v875
        %v1836 = vmul.f32 %v1772, %v876
        %v1837 = vmul.f32 %v1773, %v877
        %v1838 = vmul.f32 %v1774, %v878
        %v1839 = vmul.f32 %v1775, %v879
        %v1840 = vmul.f32 %v1776, %v880
        %v1841 = vmul.f32 %v1777, %v881
        %v1842 = vmul.f32 %v1778, %v882
        %v1843 = vmul.f32 %v1779, %v883
        %v1844 = vmul.f32 %v1780, %v884
        %v1845 = vmul.f32 %v1781, %v885
        %v1846 = vmul.f32 %v1782, %v886
        %v1847 = vmul.f32 %v1783, %v887
        %v1848 = vmul.f32 %v1784, %v888
        %v1849 = vmul.f32 %v1785, %v889
        %v1850 = vmul.f32 %v1786, %v890
        %v1851 = vmul.f32 %v1787, %v891
        %v1852 = vmul.f32 %v1788, %v892
        %v1853 = vmul.f32 %v1789, %v893
        %v1854 = vmul.f32 %v1790, %v894
        %v1855 = vmul.f32 %v1791, %v895
        %v1856 = vmul.f32 %v1792, 1.442695
        %v1857 = vpow.pop %v1856
        %v1858 = vmul.f32 %v1793, 1.442695
        %v1859 = vpow.pop %v1858
        %v1860 = vmul.f32 %v1794, 1.442695
        %v1861 = vpow.pop %v1860
        %v1862 = vmul.f32 %v1795, 1.442695
        %v1863 = vpow.pop %v1862
        %v1864 = vmul.f32 %v1796, 1.442695
        %v1865 = vpow.pop %v1864
        %v1866 = vmul.f32 %v1797, 1.442695
        %v1867 = vpow.pop %v1866
        %v1868 = vmul.f32 %v1798, 1.442695
        %v1869 = vpow.pop %v1868
        %v1870 = vmul.f32 %v1799, 1.442695
        %v1871 = vpow.pop %v1870
        %v1872 = vmul.f32 %v1800, 1.442695
        %v1873 = vpow.pop %v1872
        %v1874 = vmul.f32 %v1801, 1.442695
        %v1875 = vpow.pop %v1874
        %v1876 = vmul.f32 %v1802, 1.442695
        %v1877 = vpow.pop %v1876
        %v1878 = vmul.f32 %v1803, 1.442695
        %v1879 = vpow.pop %v1878
        %v1880 = vmul.f32 %v1804, 1.442695
        %v1881 = vpow.pop %v1880
        %v1882 = vmul.f32 %v1805, 1.442695
        %v1883 = vpow.pop %v1882
        %v1884 = vmul.f32 %v1806, 1.442695
        %v1885 = vpow.pop %v1884
        %v1886 = vmul.f32 %v1807, 1.442695
        %v1887 = vpow.pop %v1886
        %v1888 = vmul.f32 %v1808, 1.442695
        %v1889 = vpow.pop %v1888
        %v1890 = vmul.f32 %v1809, 1.442695
        %v1891 = vpow.pop %v1890
        %v1892 = vmul.f32 %v1810, 1.442695
        %v1893 = vpow.pop %v1892
        %v1894 = vmul.f32 %v1811, 1.442695
        %v1895 = vpow.pop %v1894
        %v1896 = vmul.f32 %v1812, 1.442695
        %v1897 = vpow.pop %v1896
        %v1898 = vmul.f32 %v1813, 1.442695
        %v1899 = vpow.pop %v1898
        %v1900 = vmul.f32 %v1814, 1.442695
        %v1901 = vpow.pop %v1900
        %v1902 = vmul.f32 %v1815, 1.442695
        %v1903 = vpow.pop %v1902
        %v1904 = vmul.f32 %v1816, 1.442695
        %v1905 = vpow.pop %v1904
        %v1906 = vmul.f32 %v1817, 1.442695
        %v1907 = vpow.pop %v1906
        %v1908 = vmul.f32 %v1818, 1.442695
        %v1909 = vpow.pop %v1908
        %v1910 = vmul.f32 %v1819, 1.442695
        %v1911 = vpow.pop %v1910
        %v1912 = vmul.f32 %v1820, 1.442695
        %v1913 = vpow.pop %v1912
        %v1914 = vmul.f32 %v1821, 1.442695
        %v1915 = vpow.pop %v1914
        %v1916 = vmul.f32 %v1822, 1.442695
        %v1917 = vpow.pop %v1916
        %v1918 = vmul.f32 %v1823, 1.442695
        %v1919 = vpow.pop %v1918
        %v1920 = vmul.f32 %v1824, 1.442695
        %v1921 = vpow.pop %v1920
        %v1922 = vmul.f32 %v1825, 1.442695
        %v1923 = vpow.pop %v1922
        %v1924 = vmul.f32 %v1826, 1.442695
        %v1925 = vpow.pop %v1924
        %v1926 = vmul.f32 %v1827, 1.442695
        %v1927 = vpow.pop %v1926
        %v1928 = vmul.f32 %v1828, 1.442695
        %v1929 = vpow.pop %v1928
        %v1930 = vmul.f32 %v1829, 1.442695
        %v1931 = vpow.pop %v1930
        %v1932 = vmul.f32 %v1830, 1.442695
        %v1933 = vpow.pop %v1932
        %v1934 = vmul.f32 %v1831, 1.442695
        %v1935 = vpow.pop %v1934
        %v1936 = vmul.f32 %v1832, 1.442695
        %v1937 = vpow.pop %v1936
        %v1938 = vmul.f32 %v1833, 1.442695
        %v1939 = vpow.pop %v1938
        %v1940 = vmul.f32 %v1834, 1.442695
        %v1941 = vpow.pop %v1940
        %v1942 = vmul.f32 %v1835, 1.442695
        %v1943 = vpow.pop %v1942
        %v1944 = vmul.f32 %v1836, 1.442695
        %v1945 = vpow.pop %v1944
        %v1946 = vmul.f32 %v1837, 1.442695
        %v1947 = vpow.pop %v1946
        %v1948 = vmul.f32 %v1838, 1.442695
        %v1949 = vpow.pop %v1948
        %v1950 = vmul.f32 %v1839, 1.442695
        %v1951 = vpow.pop %v1950
        %v1952 = vmul.f32 %v1840, 1.442695
        %v1953 = vpow.pop %v1952
        %v1954 = vmul.f32 %v1841, 1.442695
        %v1955 = vpow.pop %v1954
        %v1956 = vmul.f32 %v1842, 1.442695
        %v1957 = vpow.pop %v1956
        %v1958 = vmul.f32 %v1843, 1.442695
        %v1959 = vpow.pop %v1958
        %v1960 = vmul.f32 %v1844, 1.442695
        %v1961 = vpow.pop %v1960
        %v1962 = vmul.f32 %v1845, 1.442695
        %v1963 = vpow.pop %v1962
        %v1964 = vmul.f32 %v1846, 1.442695
        %v1965 = vpow.pop %v1964
        %v1966 = vmul.f32 %v1847, 1.442695
        %v1967 = vpow.pop %v1966
        %v1968 = vmul.f32 %v1848, 1.442695
        %v1969 = vpow.pop %v1968
        %v1970 = vmul.f32 %v1849, 1.442695
        %v1971 = vpow.pop %v1970
        %v1972 = vmul.f32 %v1850, 1.442695
        %v1973 = vpow.pop %v1972
        %v1974 = vmul.f32 %v1851, 1.442695
        %v1975 = vpow.pop %v1974
        %v1976 = vmul.f32 %v1852, 1.442695
        %v1977 = vpow.pop %v1976
        %v1978 = vmul.f32 %v1853, 1.442695
        %v1979 = vpow.pop %v1978
        %v1980 = vmul.f32 %v1854, 1.442695
        %v1981 = vpow.pop %v1980
        %v1982 = vmul.f32 %v1855, 1.442695
        %v1983 = vpow.pop %v1982
        %v1984 = vmul.f32 %v1664, %v1857
        %v1985 = vmul.f32 %v1665, %v1859
        %v1986 = vmul.f32 %v1666, %v1861
        %v1987 = vmul.f32 %v1667, %v1863
        %v1988 = vmul.f32 %v1668, %v1865
        %v1989 = vmul.f32 %v1669, %v1867
        %v1990 = vmul.f32 %v1670, %v1869
        %v1991 = vmul.f32 %v1671, %v1871
        %v1992 = vmul.f32 %v1672, %v1873
        %v1993 = vmul.f32 %v1673, %v1875
        %v1994 = vmul.f32 %v1674, %v1877
        %v1995 = vmul.f32 %v1675, %v1879
        %v1996 = vmul.f32 %v1676, %v1881
        %v1997 = vmul.f32 %v1677, %v1883
        %v1998 = vmul.f32 %v1678, %v1885
        %v1999 = vmul.f32 %v1679, %v1887
        %v2000 = vmul.f32 %v1680, %v1889
        %v2001 = vmul.f32 %v1681, %v1891
        %v2002 = vmul.f32 %v1682, %v1893
        %v2003 = vmul.f32 %v1683, %v1895
        %v2004 = vmul.f32 %v1684, %v1897
        %v2005 = vmul.f32 %v1685, %v1899
        %v2006 = vmul.f32 %v1686, %v1901
        %v2007 = vmul.f32 %v1687, %v1903
        %v2008 = vmul.f32 %v1688, %v1905
        %v2009 = vmul.f32 %v1689, %v1907
        %v2010 = vmul.f32 %v1690, %v1909
        %v2011 = vmul.f32 %v1691, %v1911
        %v2012 = vmul.f32 %v1692, %v1913
        %v2013 = vmul.f32 %v1693, %v1915
        %v2014 = vmul.f32 %v1694, %v1917
        %v2015 = vmul.f32 %v1695, %v1919
        %v2016 = vmul.f32 %v1696, %v1921
        %v2017 = vmul.f32 %v1697, %v1923
        %v2018 = vmul.f32 %v1698, %v1925
        %v2019 = vmul.f32 %v1699, %v1927
        %v2020 = vmul.f32 %v1700, %v1929
        %v2021 = vmul.f32 %v1701, %v1931
        %v2022 = vmul.f32 %v1702, %v1933
        %v2023 = vmul.f32 %v1703, %v1935
        %v2024 = vmul.f32 %v1704, %v1937
        %v2025 = vmul.f32 %v1705, %v1939
        %v2026 = vmul.f32 %v1706, %v1941
        %v2027 = vmul.f32 %v1707, %v1943
        %v2028 = vmul.f32 %v1708, %v1945
        %v2029 = vmul.f32 %v1709, %v1947
        %v2030 = vmul.f32 %v1710, %v1949
        %v2031 = vmul.f32 %v1711, %v1951
        %v2032 = vmul.f32 %v1712, %v1953
        %v2033 = vmul.f32 %v1713, %v1955
        %v2034 = vmul.f32 %v1714, %v1957
        %v2035 = vmul.f32 %v1715, %v1959
        %v2036 = vmul.f32 %v1716, %v1961
        %v2037 = vmul.f32 %v1717, %v1963
        %v2038 = vmul.f32 %v1718, %v1965
        %v2039 = vmul.f32 %v1719, %v1967
        %v2040 = vmul.f32 %v1720, %v1969
        %v2041 = vmul.f32 %v1721, %v1971
        %v2042 = vmul.f32 %v1722, %v1973
        %v2043 = vmul.f32 %v1723, %v1975
        %v2044 = vmul.f32 %v1724, %v1977
        %v2045 = vmul.f32 %v1725, %v1979
        %v2046 = vmul.f32 %v1726, %v1981
        %v2047 = vmul.f32 %v1727, %v1983
        %v2048 = vsub.f32 1.0, %v1984
        %v2049 = vsub.f32 1.0, %v1985
        %v2050 = vsub.f32 1.0, %v1986
        %v2051 = vsub.f32 1.0, %v1987
        %v2052 = vsub.f32 1.0, %v1988
        %v2053 = vsub.f32 1.0, %v1989
        %v2054 = vsub.f32 1.0, %v1990
        %v2055 = vsub.f32 1.0, %v1991
        %v2056 = vsub.f32 1.0, %v1992
        %v2057 = vsub.f32 1.0, %v1993
        %v2058 = vsub.f32 1.0, %v1994
        %v2059 = vsub.f32 1.0, %v1995
        %v2060 = vsub.f32 1.0, %v1996
        %v2061 = vsub.f32 1.0, %v1997
        %v2062 = vsub.f32 1.0, %v1998
        %v2063 = vsub.f32 1.0, %v1999
        %v2064 = vsub.f32 1.0, %v2000
        %v2065 = vsub.f32 1.0, %v2001
        %v2066 = vsub.f32 1.0, %v2002
        %v2067 = vsub.f32 1.0, %v2003
        %v2068 = vsub.f32 1.0, %v2004
        %v2069 = vsub.f32 1.0, %v2005
        %v2070 = vsub.f32 1.0, %v2006
        %v2071 = vsub.f32 1.0, %v2007
        %v2072 = vsub.f32 1.0, %v2008
        %v2073 = vsub.f32 1.0, %v2009
        %v2074 = vsub.f32 1.0, %v2010
        %v2075 = vsub.f32 1.0, %v2011
        %v2076 = vsub.f32 1.0, %v2012
        %v2077 = vsub.f32 1.0, %v2013
        %v2078 = vsub.f32 1.0, %v2014
        %v2079 = vsub.f32 1.0, %v2015
        %v2080 = vsub.f32 1.0, %v2016
        %v2081 = vsub.f32 1.0, %v2017
        %v2082 = vsub.f32 1.0, %v2018
        %v2083 = vsub.f32 1.0, %v2019
        %v2084 = vsub.f32 1.0, %v2020
        %v2085 = vsub.f32 1.0, %v2021
        %v2086 = vsub.f32 1.0, %v2022
        %v2087 = vsub.f32 1.0, %v2023
        %v2088 = vsub.f32 1.0, %v2024
        %v2089 = vsub.f32 1.0, %v2025
        %v2090 = vsub.f32 1.0, %v2026
        %v2091 = vsub.f32 1.0, %v2027
        %v2092 = vsub.f32 1.0, %v2028
        %v2093 = vsub.f32 1.0, %v2029
        %v2094 = vsub.f32 1.0, %v2030
        %v2095 = vsub.f32 1.0, %v2031
        %v2096 = vsub.f32 1.0, %v2032
        %v2097 = vsub.f32 1.0, %v2033
        %v2098 = vsub.f32 1.0, %v2034
        %v2099 = vsub.f32 1.0, %v2035
        %v2100 = vsub.f32 1.0, %v2036
        %v2101 = vsub.f32 1.0, %v2037
        %v2102 = vsub.f32 1.0, %v2038
        %v2103 = vsub.f32 1.0, %v2039
        %v2104 = vsub.f32 1.0, %v2040
        %v2105 = vsub.f32 1.0, %v2041
        %v2106 = vsub.f32 1.0, %v2042
        %v2107 = vsub.f32 1.0, %v2043
        %v2108 = vsub.f32 1.0, %v2044
        %v2109 = vsub.f32 1.0, %v2045
        %v2110 = vsub.f32 1.0, %v2046
        %v2111 = vsub.f32 1.0, %v2047
        %vm2112 = vcmp.lt.f32.partialorder %v768, 0.0
        %vm2113 = vcmp.lt.f32.partialorder %v769, 0.0
        %vm2114 = vcmp.lt.f32.partialorder %v770, 0.0
        %vm2115 = vcmp.lt.f32.partialorder %v771, 0.0
        %vm2116 = vcmp.lt.f32.partialorder %v772, 0.0
        %vm2117 = vcmp.lt.f32.partialorder %v773, 0.0
        %vm2118 = vcmp.lt.f32.partialorder %v774, 0.0
        %vm2119 = vcmp.lt.f32.partialorder %v775, 0.0
        %vm2120 = vcmp.lt.f32.partialorder %v776, 0.0
        %vm2121 = vcmp.lt.f32.partialorder %v777, 0.0
        %vm2122 = vcmp.lt.f32.partialorder %v778, 0.0
        %vm2123 = vcmp.lt.f32.partialorder %v779, 0.0
        %vm2124 = vcmp.lt.f32.partialorder %v780, 0.0
        %vm2125 = vcmp.lt.f32.partialorder %v781, 0.0
        %vm2126 = vcmp.lt.f32.partialorder %v782, 0.0
        %vm2127 = vcmp.lt.f32.partialorder %v783, 0.0
        %vm2128 = vcmp.lt.f32.partialorder %v784, 0.0
        %vm2129 = vcmp.lt.f32.partialorder %v785, 0.0
        %vm2130 = vcmp.lt.f32.partialorder %v786, 0.0
        %vm2131 = vcmp.lt.f32.partialorder %v787, 0.0
        %vm2132 = vcmp.lt.f32.partialorder %v788, 0.0
        %vm2133 = vcmp.lt.f32.partialorder %v789, 0.0
        %vm2134 = vcmp.lt.f32.partialorder %v790, 0.0
        %vm2135 = vcmp.lt.f32.partialorder %v791, 0.0
        %vm2136 = vcmp.lt.f32.partialorder %v792, 0.0
        %vm2137 = vcmp.lt.f32.partialorder %v793, 0.0
        %vm2138 = vcmp.lt.f32.partialorder %v794, 0.0
        %vm2139 = vcmp.lt.f32.partialorder %v795, 0.0
        %vm2140 = vcmp.lt.f32.partialorder %v796, 0.0
        %vm2141 = vcmp.lt.f32.partialorder %v797, 0.0
        %vm2142 = vcmp.lt.f32.partialorder %v798, 0.0
        %vm2143 = vcmp.lt.f32.partialorder %v799, 0.0
        %vm2144 = vcmp.lt.f32.partialorder %v800, 0.0
        %vm2145 = vcmp.lt.f32.partialorder %v801, 0.0
        %vm2146 = vcmp.lt.f32.partialorder %v802, 0.0
        %vm2147 = vcmp.lt.f32.partialorder %v803, 0.0
        %vm2148 = vcmp.lt.f32.partialorder %v804, 0.0
        %vm2149 = vcmp.lt.f32.partialorder %v805, 0.0
        %vm2150 = vcmp.lt.f32.partialorder %v806, 0.0
        %vm2151 = vcmp.lt.f32.partialorder %v807, 0.0
        %vm2152 = vcmp.lt.f32.partialorder %v808, 0.0
        %vm2153 = vcmp.lt.f32.partialorder %v809, 0.0
        %vm2154 = vcmp.lt.f32.partialorder %v810, 0.0
        %vm2155 = vcmp.lt.f32.partialorder %v811, 0.0
        %vm2156 = vcmp.lt.f32.partialorder %v812, 0.0
        %vm2157 = vcmp.lt.f32.partialorder %v813, 0.0
        %vm2158 = vcmp.lt.f32.partialorder %v814, 0.0
        %vm2159 = vcmp.lt.f32.partialorder %v815, 0.0
        %vm2160 = vcmp.lt.f32.partialorder %v816, 0.0
        %vm2161 = vcmp.lt.f32.partialorder %v817, 0.0
        %vm2162 = vcmp.lt.f32.partialorder %v818, 0.0
        %vm2163 = vcmp.lt.f32.partialorder %v819, 0.0
        %vm2164 = vcmp.lt.f32.partialorder %v820, 0.0
        %vm2165 = vcmp.lt.f32.partialorder %v821, 0.0
        %vm2166 = vcmp.lt.f32.partialorder %v822, 0.0
        %vm2167 = vcmp.lt.f32.partialorder %v823, 0.0
        %vm2168 = vcmp.lt.f32.partialorder %v824, 0.0
        %vm2169 = vcmp.lt.f32.partialorder %v825, 0.0
        %vm2170 = vcmp.lt.f32.partialorder %v826, 0.0
        %vm2171 = vcmp.lt.f32.partialorder %v827, 0.0
        %vm2172 = vcmp.lt.f32.partialorder %v828, 0.0
        %vm2173 = vcmp.lt.f32.partialorder %v829, 0.0
        %vm2174 = vcmp.lt.f32.partialorder %v830, 0.0
        %vm2175 = vcmp.lt.f32.partialorder %v831, 0.0
        %v2176 = vsub.f32 0.0, %v2048
        %v2177 = vsub.f32 0.0, %v2049
        %v2178 = vsub.f32 0.0, %v2050
        %v2179 = vsub.f32 0.0, %v2051
        %v2180 = vsub.f32 0.0, %v2052
        %v2181 = vsub.f32 0.0, %v2053
        %v2182 = vsub.f32 0.0, %v2054
        %v2183 = vsub.f32 0.0, %v2055
        %v2184 = vsub.f32 0.0, %v2056
        %v2185 = vsub.f32 0.0, %v2057
        %v2186 = vsub.f32 0.0, %v2058
        %v2187 = vsub.f32 0.0, %v2059
        %v2188 = vsub.f32 0.0, %v2060
        %v2189 = vsub.f32 0.0, %v2061
        %v2190 = vsub.f32 0.0, %v2062
        %v2191 = vsub.f32 0.0, %v2063
        %v2192 = vsub.f32 0.0, %v2064
        %v2193 = vsub.f32 0.0, %v2065
        %v2194 = vsub.f32 0.0, %v2066
        %v2195 = vsub.f32 0.0, %v2067
        %v2196 = vsub.f32 0.0, %v2068
        %v2197 = vsub.f32 0.0, %v2069
        %v2198 = vsub.f32 0.0, %v2070
        %v2199 = vsub.f32 0.0, %v2071
        %v2200 = vsub.f32 0.0, %v2072
        %v2201 = vsub.f32 0.0, %v2073
        %v2202 = vsub.f32 0.0, %v2074
        %v2203 = vsub.f32 0.0, %v2075
        %v2204 = vsub.f32 0.0, %v2076
        %v2205 = vsub.f32 0.0, %v2077
        %v2206 = vsub.f32 0.0, %v2078
        %v2207 = vsub.f32 0.0, %v2079
        %v2208 = vsub.f32 0.0, %v2080
        %v2209 = vsub.f32 0.0, %v2081
        %v2210 = vsub.f32 0.0, %v2082
        %v2211 = vsub.f32 0.0, %v2083
        %v2212 = vsub.f32 0.0, %v2084
        %v2213 = vsub.f32 0.0, %v2085
        %v2214 = vsub.f32 0.0, %v2086
        %v2215 = vsub.f32 0.0, %v2087
        %v2216 = vsub.f32 0.0, %v2088
        %v2217 = vsub.f32 0.0, %v2089
        %v2218 = vsub.f32 0.0, %v2090
        %v2219 = vsub.f32 0.0, %v2091
        %v2220 = vsub.f32 0.0, %v2092
        %v2221 = vsub.f32 0.0, %v2093
        %v2222 = vsub.f32 0.0, %v2094
        %v2223 = vsub.f32 0.0, %v2095
        %v2224 = vsub.f32 0.0, %v2096
        %v2225 = vsub.f32 0.0, %v2097
        %v2226 = vsub.f32 0.0, %v2098
        %v2227 = vsub.f32 0.0, %v2099
        %v2228 = vsub.f32 0.0, %v2100
        %v2229 = vsub.f32 0.0, %v2101
        %v2230 = vsub.f32 0.0, %v2102
        %v2231 = vsub.f32 0.0, %v2103
        %v2232 = vsub.f32 0.0, %v2104
        %v2233 = vsub.f32 0.0, %v2105
        %v2234 = vsub.f32 0.0, %v2106
        %v2235 = vsub.f32 0.0, %v2107
        %v2236 = vsub.f32 0.0, %v2108
        %v2237 = vsub.f32 0.0, %v2109
        %v2238 = vsub.f32 0.0, %v2110
        %v2239 = vsub.f32 0.0, %v2111
        %v2240 = vsel %vm2112, %v2176, %v2048
        %v2241 = vsel %vm2113, %v2177, %v2049
        %v2242 = vsel %vm2114, %v2178, %v2050
        %v2243 = vsel %vm2115, %v2179, %v2051
        %v2244 = vsel %vm2116, %v2180, %v2052
        %v2245 = vsel %vm2117, %v2181, %v2053
        %v2246 = vsel %vm2118, %v2182, %v2054
        %v2247 = vsel %vm2119, %v2183, %v2055
        %v2248 = vsel %vm2120, %v2184, %v2056
        %v2249 = vsel %vm2121, %v2185, %v2057
        %v2250 = vsel %vm2122, %v2186, %v2058
        %v2251 = vsel %vm2123, %v2187, %v2059
        %v2252 = vsel %vm2124, %v2188, %v2060
        %v2253 = vsel %vm2125, %v2189, %v2061
        %v2254 = vsel %vm2126, %v2190, %v2062
        %v2255 = vsel %vm2127, %v2191, %v2063
        %v2256 = vsel %vm2128, %v2192, %v2064
        %v2257 = vsel %vm2129, %v2193, %v2065
        %v2258 = vsel %vm2130, %v2194, %v2066
        %v2259 = vsel %vm2131, %v2195, %v2067
        %v2260 = vsel %vm2132, %v2196, %v2068
        %v2261 = vsel %vm2133, %v2197, %v2069
        %v2262 = vsel %vm2134, %v2198, %v2070
        %v2263 = vsel %vm2135, %v2199, %v2071
        %v2264 = vsel %vm2136, %v2200, %v2072
        %v2265 = vsel %vm2137, %v2201, %v2073
        %v2266 = vsel %vm2138, %v2202, %v2074
        %v2267 = vsel %vm2139, %v2203, %v2075
        %v2268 = vsel %vm2140, %v2204, %v2076
        %v2269 = vsel %vm2141, %v2205, %v2077
        %v2270 = vsel %vm2142, %v2206, %v2078
        %v2271 = vsel %vm2143, %v2207, %v2079
        %v2272 = vsel %vm2144, %v2208, %v2080
        %v2273 = vsel %vm2145, %v2209, %v2081
        %v2274 = vsel %vm2146, %v2210, %v2082
        %v2275 = vsel %vm2147, %v2211, %v2083
        %v2276 = vsel %vm2148, %v2212, %v2084
        %v2277 = vsel %vm2149, %v2213, %v2085
        %v2278 = vsel %vm2150, %v2214, %v2086
        %v2279 = vsel %vm2151, %v2215, %v2087
        %v2280 = vsel %vm2152, %v2216, %v2088
        %v2281 = vsel %vm2153, %v2217, %v2089
        %v2282 = vsel %vm2154, %v2218, %v2090
        %v2283 = vsel %vm2155, %v2219, %v2091
        %v2284 = vsel %vm2156, %v2220, %v2092
        %v2285 = vsel %vm2157, %v2221, %v2093
        %v2286 = vsel %vm2158, %v2222, %v2094
        %v2287 = vsel %vm2159, %v2223, %v2095
        %v2288 = vsel %vm2160, %v2224, %v2096
        %v2289 = vsel %vm2161, %v2225, %v2097
        %v2290 = vsel %vm2162, %v2226, %v2098
        %v2291 = vsel %vm2163, %v2227, %v2099
        %v2292 = vsel %vm2164, %v2228, %v2100
        %v2293 = vsel %vm2165, %v2229, %v2101
        %v2294 = vsel %vm2166, %v2230, %v2102
        %v2295 = vsel %vm2167, %v2231, %v2103
        %v2296 = vsel %vm2168, %v2232, %v2104
        %v2297 = vsel %vm2169, %v2233, %v2105
        %v2298 = vsel %vm2170, %v2234, %v2106
        %v2299 = vsel %vm2171, %v2235, %v2107
        %v2300 = vsel %vm2172, %v2236, %v2108
        %v2301 = vsel %vm2173, %v2237, %v2109
        %v2302 = vsel %vm2174, %v2238, %v2110
        %v2303 = vsel %vm2175, %v2239, %v2111
        %v2304 = vadd.f32 %v2240, 1.0
        %v2305 = vadd.f32 %v2241, 1.0
        %v2306 = vadd.f32 %v2242, 1.0
        %v2307 = vadd.f32 %v2243, 1.0
        %v2308 = vadd.f32 %v2244, 1.0
        %v2309 = vadd.f32 %v2245, 1.0
        %v2310 = vadd.f32 %v2246, 1.0
        %v2311 = vadd.f32 %v2247, 1.0
        %v2312 = vadd.f32 %v2248, 1.0
        %v2313 = vadd.f32 %v2249, 1.0
        %v2314 = vadd.f32 %v2250, 1.0
        %v2315 = vadd.f32 %v2251, 1.0
        %v2316 = vadd.f32 %v2252, 1.0
        %v2317 = vadd.f32 %v2253, 1.0
        %v2318 = vadd.f32 %v2254, 1.0
        %v2319 = vadd.f32 %v2255, 1.0
        %v2320 = vadd.f32 %v2256, 1.0
        %v2321 = vadd.f32 %v2257, 1.0
        %v2322 = vadd.f32 %v2258, 1.0
        %v2323 = vadd.f32 %v2259, 1.0
        %v2324 = vadd.f32 %v2260, 1.0
        %v2325 = vadd.f32 %v2261, 1.0
        %v2326 = vadd.f32 %v2262, 1.0
        %v2327 = vadd.f32 %v2263, 1.0
        %v2328 = vadd.f32 %v2264, 1.0
        %v2329 = vadd.f32 %v2265, 1.0
        %v2330 = vadd.f32 %v2266, 1.0
        %v2331 = vadd.f32 %v2267, 1.0
        %v2332 = vadd.f32 %v2268, 1.0
        %v2333 = vadd.f32 %v2269, 1.0
        %v2334 = vadd.f32 %v2270, 1.0
        %v2335 = vadd.f32 %v2271, 1.0
        %v2336 = vadd.f32 %v2272, 1.0
        %v2337 = vadd.f32 %v2273, 1.0
        %v2338 = vadd.f32 %v2274, 1.0
        %v2339 = vadd.f32 %v2275, 1.0
        %v2340 = vadd.f32 %v2276, 1.0
        %v2341 = vadd.f32 %v2277, 1.0
        %v2342 = vadd.f32 %v2278, 1.0
        %v2343 = vadd.f32 %v2279, 1.0
        %v2344 = vadd.f32 %v2280, 1.0
        %v2345 = vadd.f32 %v2281, 1.0
        %v2346 = vadd.f32 %v2282, 1.0
        %v2347 = vadd.f32 %v2283, 1.0
        %v2348 = vadd.f32 %v2284, 1.0
        %v2349 = vadd.f32 %v2285, 1.0
        %v2350 = vadd.f32 %v2286, 1.0
        %v2351 = vadd.f32 %v2287, 1.0
        %v2352 = vadd.f32 %v2288, 1.0
        %v2353 = vadd.f32 %v2289, 1.0
        %v2354 = vadd.f32 %v2290, 1.0
        %v2355 = vadd.f32 %v2291, 1.0
        %v2356 = vadd.f32 %v2292, 1.0
        %v2357 = vadd.f32 %v2293, 1.0
        %v2358 = vadd.f32 %v2294, 1.0
        %v2359 = vadd.f32 %v2295, 1.0
        %v2360 = vadd.f32 %v2296, 1.0
        %v2361 = vadd.f32 %v2297, 1.0
        %v2362 = vadd.f32 %v2298, 1.0
        %v2363 = vadd.f32 %v2299, 1.0
        %v2364 = vadd.f32 %v2300, 1.0
        %v2365 = vadd.f32 %v2301, 1.0
        %v2366 = vadd.f32 %v2302, 1.0
        %v2367 = vadd.f32 %v2303, 1.0
        %v2368 = vmul.f32 %v704, %v2304
        %v2369 = vmul.f32 %v705, %v2305
        %v2370 = vmul.f32 %v706, %v2306
        %v2371 = vmul.f32 %v707, %v2307
        %v2372 = vmul.f32 %v708, %v2308
        %v2373 = vmul.f32 %v709, %v2309
        %v2374 = vmul.f32 %v710, %v2310
        %v2375 = vmul.f32 %v711, %v2311
        %v2376 = vmul.f32 %v712, %v2312
        %v2377 = vmul.f32 %v713, %v2313
        %v2378 = vmul.f32 %v714, %v2314
        %v2379 = vmul.f32 %v715, %v2315
        %v2380 = vmul.f32 %v716, %v2316
        %v2381 = vmul.f32 %v717, %v2317
        %v2382 = vmul.f32 %v718, %v2318
        %v2383 = vmul.f32 %v719, %v2319
        %v2384 = vmul.f32 %v720, %v2320
        %v2385 = vmul.f32 %v721, %v2321
        %v2386 = vmul.f32 %v722, %v2322
        %v2387 = vmul.f32 %v723, %v2323
        %v2388 = vmul.f32 %v724, %v2324
        %v2389 = vmul.f32 %v725, %v2325
        %v2390 = vmul.f32 %v726, %v2326
        %v2391 = vmul.f32 %v727, %v2327
        %v2392 = vmul.f32 %v728, %v2328
        %v2393 = vmul.f32 %v729, %v2329
        %v2394 = vmul.f32 %v730, %v2330
        %v2395 = vmul.f32 %v731, %v2331
        %v2396 = vmul.f32 %v732, %v2332
        %v2397 = vmul.f32 %v733, %v2333
        %v2398 = vmul.f32 %v734, %v2334
        %v2399 = vmul.f32 %v735, %v2335
        %v2400 = vmul.f32 %v736, %v2336
        %v2401 = vmul.f32 %v737, %v2337
        %v2402 = vmul.f32 %v738, %v2338
        %v2403 = vmul.f32 %v739, %v2339
        %v2404 = vmul.f32 %v740, %v2340
        %v2405 = vmul.f32 %v741, %v2341
        %v2406 = vmul.f32 %v742, %v2342
        %v2407 = vmul.f32 %v743, %v2343
        %v2408 = vmul.f32 %v744, %v2344
        %v2409 = vmul.f32 %v745, %v2345
        %v2410 = vmul.f32 %v746, %v2346
        %v2411 = vmul.f32 %v747, %v2347
        %v2412 = vmul.f32 %v748, %v2348
        %v2413 = vmul.f32 %v749, %v2349
        %v2414 = vmul.f32 %v750, %v2350
        %v2415 = vmul.f32 %v751, %v2351
        %v2416 = vmul.f32 %v752, %v2352
        %v2417 = vmul.f32 %v753, %v2353
        %v2418 = vmul.f32 %v754, %v2354
        %v2419 = vmul.f32 %v755, %v2355
        %v2420 = vmul.f32 %v756, %v2356
        %v2421 = vmul.f32 %v757, %v2357
        %v2422 = vmul.f32 %v758, %v2358
        %v2423 = vmul.f32 %v759, %v2359
        %v2424 = vmul.f32 %v760, %v2360
        %v2425 = vmul.f32 %v761, %v2361
        %v2426 = vmul.f32 %v762, %v2362
        %v2427 = vmul.f32 %v763, %v2363
        %v2428 = vmul.f32 %v764, %v2364
        %v2429 = vmul.f32 %v765, %v2365
        %v2430 = vmul.f32 %v766, %v2366
        %v2431 = vmul.f32 %v767, %v2367
        %v2432 = vpack.c.bf16 %v2370, %v2368
        %v2433 = vpack.c.bf16 %v2371, %v2369
        %v2434 = vpack.c.bf16 %v2374, %v2372
        %v2435 = vpack.c.bf16 %v2375, %v2373
        %v2436 = vpack.c.bf16 %v2378, %v2376
        %v2437 = vpack.c.bf16 %v2379, %v2377
        %v2438 = vpack.c.bf16 %v2382, %v2380
        %v2439 = vpack.c.bf16 %v2383, %v2381
        %v2440 = vpack.c.bf16 %v2386, %v2384
        %v2441 = vpack.c.bf16 %v2387, %v2385
        %v2442 = vpack.c.bf16 %v2390, %v2388
        %v2443 = vpack.c.bf16 %v2391, %v2389
        %v2444 = vpack.c.bf16 %v2394, %v2392
        %v2445 = vpack.c.bf16 %v2395, %v2393
        %v2446 = vpack.c.bf16 %v2398, %v2396
        %v2447 = vpack.c.bf16 %v2399, %v2397
        %v2448 = vpack.c.bf16 %v2402, %v2400
        %v2449 = vpack.c.bf16 %v2403, %v2401
        %v2450 = vpack.c.bf16 %v2406, %v2404
        %v2451 = vpack.c.bf16 %v2407, %v2405
        %v2452 = vpack.c.bf16 %v2410, %v2408
        %v2453 = vpack.c.bf16 %v2411, %v2409
        %v2454 = vpack.c.bf16 %v2414, %v2412
        %v2455 = vpack.c.bf16 %v2415, %v2413
        %v2456 = vpack.c.bf16 %v2418, %v2416
        %v2457 = vpack.c.bf16 %v2419, %v2417
        %v2458 = vpack.c.bf16 %v2422, %v2420
        %v2459 = vpack.c.bf16 %v2423, %v2421
        %v2460 = vpack.c.bf16 %v2426, %v2424
        %v2461 = vpack.c.bf16 %v2427, %v2425
        %v2462 = vpack.c.bf16 %v2430, %v2428
        %v2463 = vpack.c.bf16 %v2431, %v2429
        %v2464 = vld [vmem:[#allocation7] sm:$0xf]
        %v2465 = vld [vmem:[#allocation7 + $0x4] sm:$0xf]
        %v2466 = vld [vmem:[#allocation7 + $0x8] sm:$0xf]
        %v2467 = vld [vmem:[#allocation7 + $0xc] sm:$0xf]
        %v2468 = vld [vmem:[#allocation7 + $0x10] sm:$0xf]
        %v2469 = vld [vmem:[#allocation7 + $0x14] sm:$0xf]
        %v2470 = vld [vmem:[#allocation7 + $0x18] sm:$0xf]
        %v2471 = vld [vmem:[#allocation7 + $0x1c] sm:$0xf]
        %v2472 = vld [vmem:[#allocation7 + $0x20] sm:$0xf]
        %v2473 = vld [vmem:[#allocation7 + $0x24] sm:$0xf]
        %v2474 = vld [vmem:[#allocation7 + $0x28] sm:$0xf]
        %v2475 = vld [vmem:[#allocation7 + $0x2c] sm:$0xf]
        %v2476 = vld [vmem:[#allocation7 + $0x30] sm:$0xf]
        %v2477 = vld [vmem:[#allocation7 + $0x34] sm:$0xf]
        %v2478 = vld [vmem:[#allocation7 + $0x38] sm:$0xf]
        %v2479 = vld [vmem:[#allocation7 + $0x3c] sm:$0xf]
        %v2480 = vld [vmem:[#allocation7 + $0x40] sm:$0xf]
        %v2481 = vld [vmem:[#allocation7 + $0x44] sm:$0xf]
        %v2482 = vld [vmem:[#allocation7 + $0x48] sm:$0xf]
        %v2483 = vld [vmem:[#allocation7 + $0x4c] sm:$0xf]
        %v2484 = vld [vmem:[#allocation7 + $0x50] sm:$0xf]
        %v2485 = vld [vmem:[#allocation7 + $0x54] sm:$0xf]
        %v2486 = vld [vmem:[#allocation7 + $0x58] sm:$0xf]
        %v2487 = vld [vmem:[#allocation7 + $0x5c] sm:$0xf]
        %v2488 = vld [vmem:[#allocation7 + $0x60] sm:$0xf]
        %v2489 = vld [vmem:[#allocation7 + $0x64] sm:$0xf]
        %v2490 = vld [vmem:[#allocation7 + $0x68] sm:$0xf]
        %v2491 = vld [vmem:[#allocation7 + $0x6c] sm:$0xf]
        %v2492 = vld [vmem:[#allocation7 + $0x70] sm:$0xf]
        %v2493 = vld [vmem:[#allocation7 + $0x74] sm:$0xf]
        %v2494 = vld [vmem:[#allocation7 + $0x78] sm:$0xf]
        %v2495 = vld [vmem:[#allocation7 + $0x7c] sm:$0xf]
        %v2496 = vld [vmem:[%s4] sm:$0x1]
        %v2498 = vlaneseq
        %v2499 = vshrl.u32 %v2498, 7
        %v2500 = vsub.s32 0, %v2499
        %v2501 = vrot.slane %v2496, %v2500
        %v2535 = vunpack.c.l.b16 %v2464
        %v2536 = vunpack.c.l.b16 %v2465
        %v2537 = vunpack.c.l.b16 %v2466
        %v2538 = vunpack.c.l.b16 %v2467
        %v2539 = vunpack.c.l.b16 %v2468
        %v2540 = vunpack.c.l.b16 %v2469
        %v2541 = vunpack.c.l.b16 %v2470
        %v2542 = vunpack.c.l.b16 %v2471
        %v2543 = vunpack.c.l.b16 %v2472
        %v2544 = vunpack.c.l.b16 %v2473
        %v2545 = vunpack.c.l.b16 %v2474
        %v2546 = vunpack.c.l.b16 %v2475
        %v2547 = vunpack.c.l.b16 %v2476
        %v2548 = vunpack.c.l.b16 %v2477
        %v2549 = vunpack.c.l.b16 %v2478
        %v2550 = vunpack.c.l.b16 %v2479
        %v2551 = vunpack.c.l.b16 %v2480
        %v2552 = vunpack.c.l.b16 %v2481
        %v2553 = vunpack.c.l.b16 %v2482
        %v2554 = vunpack.c.l.b16 %v2483
        %v2555 = vunpack.c.l.b16 %v2484
        %v2556 = vunpack.c.l.b16 %v2485
        %v2557 = vunpack.c.l.b16 %v2486
        %v2558 = vunpack.c.l.b16 %v2487
        %v2559 = vunpack.c.l.b16 %v2488
        %v2560 = vunpack.c.l.b16 %v2489
        %v2561 = vunpack.c.l.b16 %v2490
        %v2562 = vunpack.c.l.b16 %v2491
        %v2563 = vunpack.c.l.b16 %v2492
        %v2564 = vunpack.c.l.b16 %v2493
        %v2565 = vunpack.c.l.b16 %v2494
        %v2566 = vunpack.c.l.b16 %v2495
        %v2567 = vpack.c.b16 %v2536, %v2535
        %v2568 = vpack.c.b16 %v2538, %v2537
        %v2569 = vpack.c.b16 %v2540, %v2539
        %v2570 = vpack.c.b16 %v2542, %v2541
        %v2571 = vpack.c.b16 %v2544, %v2543
        %v2572 = vpack.c.b16 %v2546, %v2545
        %v2573 = vpack.c.b16 %v2548, %v2547
        %v2574 = vpack.c.b16 %v2550, %v2549
        %v2575 = vpack.c.b16 %v2552, %v2551
        %v2576 = vpack.c.b16 %v2554, %v2553
        %v2577 = vpack.c.b16 %v2556, %v2555
        %v2578 = vpack.c.b16 %v2558, %v2557
        %v2579 = vpack.c.b16 %v2560, %v2559
        %v2580 = vpack.c.b16 %v2562, %v2561
        %v2581 = vpack.c.b16 %v2564, %v2563
        %v2582 = vpack.c.b16 %v2566, %v2565
        %2599 = vmatprep.subr.bf16.mxu0 0
        %2600 = vmatpush1.bf16.msra.mxu0 %v2567
        %2601 = vmatprep.subr.bf16.mxu0 0
        %2602 = vmatpush1.bf16.msra.mxu0 %v2568
        %2603 = vmatprep.subr.bf16.mxu0 0
        %2604 = vmatpush1.bf16.msra.mxu0 %v2569
        %2605 = vmatprep.subr.bf16.mxu0 0
        %2606 = vmatpush1.bf16.msra.mxu0 %v2570
        %2607 = vmatprep.subr.bf16.mxu0 0
        %2608 = vmatpush1.bf16.msra.mxu0 %v2571
        %2609 = vmatprep.subr.bf16.mxu0 0
        %2610 = vmatpush1.bf16.msra.mxu0 %v2572
        %2611 = vmatprep.subr.bf16.mxu0 0
        %2612 = vmatpush1.bf16.msra.mxu0 %v2573
        %2613 = vmatprep.subr.bf16.mxu0 0
        %2614 = vmatpush1.bf16.msra.mxu0 %v2574
        %2615 = vmatprep.subr.bf16.mxu0 0
        %2616 = vmatpush1.bf16.msra.mxu0 %v2575
        %2617 = vmatprep.subr.bf16.mxu0 0
        %2618 = vmatpush1.bf16.msra.mxu0 %v2576
        %2619 = vmatprep.subr.bf16.mxu0 0
        %2620 = vmatpush1.bf16.msra.mxu0 %v2577
        %2621 = vmatprep.subr.bf16.mxu0 0
        %2622 = vmatpush1.bf16.msra.mxu0 %v2578
        %2623 = vmatprep.subr.bf16.mxu0 0
        %2624 = vmatpush1.bf16.msra.mxu0 %v2579
        %2625 = vmatprep.subr.bf16.mxu0 0
        %2626 = vmatpush1.bf16.msra.mxu0 %v2580
        %2627 = vmatprep.subr.bf16.mxu0 0
        %2628 = vmatpush1.bf16.msra.mxu0 %v2581
        %2629 = vmatprep.subr.bf16.mxu0 0
        %2630 = vmatpush1.bf16.msra.mxu0 %v2582
        %2631 = vmatprep.mubr.bf16.mxu0 %v2433
        %2632 = vmatmul.mubr.bf16.gmra.mrb[0].mxu0 %v2432
        %v2633 = vpop.f32.mrb[0].mxu0
        %v2634 = vadd.f32 %v2501, %v2633
        %v2635 = vpop.f32.mrb[0].mxu0
        %v2636 = vpop.f32.mrb[0].mxu0
        %v2637 = vadd.f32 %v2501, %v2636
        %v2638 = vpop.f32.mrb[0].mxu0
        %2639 = vmatprep.mubr.bf16.mxu0 %v2435
        %2640 = vmatmul.mubr.bf16.gmra.mrb[0].mxu0 %v2434
        %v2641 = vpop.f32.mrb[0].mxu0
        %v2642 = vadd.f32 %v2501, %v2641
        %v2643 = vpop.f32.mrb[0].mxu0
        %v2644 = vpop.f32.mrb[0].mxu0
        %v2645 = vadd.f32 %v2501, %v2644
        %v2646 = vpop.f32.mrb[0].mxu0
        %2647 = vmatprep.mubr.bf16.mxu0 %v2437
        %2648 = vmatmul.mubr.bf16.gmra.mrb[0].mxu0 %v2436
        %v2649 = vpop.f32.mrb[0].mxu0
        %v2650 = vadd.f32 %v2501, %v2649
        %v2651 = vpop.f32.mrb[0].mxu0
        %v2652 = vpop.f32.mrb[0].mxu0
        %v2653 = vadd.f32 %v2501, %v2652
        %v2654 = vpop.f32.mrb[0].mxu0
        %2655 = vmatprep.mubr.bf16.mxu0 %v2439
        %2656 = vmatmul.mubr.bf16.gmra.mrb[0].mxu0 %v2438
        %v2657 = vpop.f32.mrb[0].mxu0
        %v2658 = vadd.f32 %v2501, %v2657
        %v2659 = vpop.f32.mrb[0].mxu0
        %v2660 = vpop.f32.mrb[0].mxu0
        %v2661 = vadd.f32 %v2501, %v2660
        %v2662 = vpop.f32.mrb[0].mxu0
        %2663 = vmatprep.mubr.bf16.mxu0 %v2441
        %2664 = vmatmul.mubr.bf16.gmra.mrb[0].mxu0 %v2440
        %v2665 = vpop.f32.mrb[0].mxu0
        %v2666 = vadd.f32 %v2501, %v2665
        %v2667 = vpop.f32.mrb[0].mxu0
        %v2668 = vpop.f32.mrb[0].mxu0
        %v2669 = vadd.f32 %v2501, %v2668
        %v2670 = vpop.f32.mrb[0].mxu0
        %2671 = vmatprep.mubr.bf16.mxu0 %v2443
        %2672 = vmatmul.mubr.bf16.gmra.mrb[0].mxu0 %v2442
        %v2673 = vpop.f32.mrb[0].mxu0
        %v2674 = vadd.f32 %v2501, %v2673
        %v2675 = vpop.f32.mrb[0].mxu0
        %v2676 = vpop.f32.mrb[0].mxu0
        %v2677 = vadd.f32 %v2501, %v2676
        %v2678 = vpop.f32.mrb[0].mxu0
        %2679 = vmatprep.mubr.bf16.mxu0 %v2445
        %2680 = vmatmul.mubr.bf16.gmra.mrb[0].mxu0 %v2444
        %v2681 = vpop.f32.mrb[0].mxu0
        %v2682 = vadd.f32 %v2501, %v2681
        %v2683 = vpop.f32.mrb[0].mxu0
        %v2684 = vpop.f32.mrb[0].mxu0
        %v2685 = vadd.f32 %v2501, %v2684
        %v2686 = vpop.f32.mrb[0].mxu0
        %2687 = vmatprep.mubr.bf16.mxu0 %v2447
        %2688 = vmatmul.mubr.bf16.gmra.mrb[0].mxu0 %v2446
        %v2689 = vpop.f32.mrb[0].mxu0
        %v2690 = vadd.f32 %v2501, %v2689
        %v2691 = vpop.f32.mrb[0].mxu0
        %v2692 = vpop.f32.mrb[0].mxu0
        %v2693 = vadd.f32 %v2501, %v2692
        %v2694 = vpop.f32.mrb[0].mxu0
        %2695 = vmatprep.mubr.bf16.mxu0 %v2449
        %2696 = vmatmul.mubr.bf16.gmra.mrb[0].mxu0 %v2448
        %v2697 = vpop.f32.mrb[0].mxu0
        %v2698 = vadd.f32 %v2501, %v2697
        %v2699 = vpop.f32.mrb[0].mxu0
        %v2700 = vpop.f32.mrb[0].mxu0
        %v2701 = vadd.f32 %v2501, %v2700
        %v2702 = vpop.f32.mrb[0].mxu0
        %2703 = vmatprep.mubr.bf16.mxu0 %v2451
        %2704 = vmatmul.mubr.bf16.gmra.mrb[0].mxu0 %v2450
        %v2705 = vpop.f32.mrb[0].mxu0
        %v2706 = vadd.f32 %v2501, %v2705
        %v2707 = vpop.f32.mrb[0].mxu0
        %v2708 = vpop.f32.mrb[0].mxu0
        %v2709 = vadd.f32 %v2501, %v2708
        %v2710 = vpop.f32.mrb[0].mxu0
        %2711 = vmatprep.mubr.bf16.mxu0 %v2453
        %2712 = vmatmul.mubr.bf16.gmra.mrb[0].mxu0 %v2452
        %v2713 = vpop.f32.mrb[0].mxu0
        %v2714 = vadd.f32 %v2501, %v2713
        %v2715 = vpop.f32.mrb[0].mxu0
        %v2716 = vpop.f32.mrb[0].mxu0
        %v2717 = vadd.f32 %v2501, %v2716
        %v2718 = vpop.f32.mrb[0].mxu0
        %2719 = vmatprep.mubr.bf16.mxu0 %v2455
        %2720 = vmatmul.mubr.bf16.gmra.mrb[0].mxu0 %v2454
        %v2721 = vpop.f32.mrb[0].mxu0
        %v2722 = vadd.f32 %v2501, %v2721
        %v2723 = vpop.f32.mrb[0].mxu0
        %v2724 = vpop.f32.mrb[0].mxu0
        %v2725 = vadd.f32 %v2501, %v2724
        %v2726 = vpop.f32.mrb[0].mxu0
        %2727 = vmatprep.mubr.bf16.mxu0 %v2457
        %2728 = vmatmul.mubr.bf16.gmra.mrb[0].mxu0 %v2456
        %v2729 = vpop.f32.mrb[0].mxu0
        %v2730 = vadd.f32 %v2501, %v2729
        %v2731 = vpop.f32.mrb[0].mxu0
        %v2732 = vpop.f32.mrb[0].mxu0
        %v2733 = vadd.f32 %v2501, %v2732
        %v2734 = vpop.f32.mrb[0].mxu0
        %2735 = vmatprep.mubr.bf16.mxu0 %v2459
        %2736 = vmatmul.mubr.bf16.gmra.mrb[0].mxu0 %v2458
        %v2737 = vpop.f32.mrb[0].mxu0
        %v2738 = vadd.f32 %v2501, %v2737
        %v2739 = vpop.f32.mrb[0].mxu0
        %v2740 = vpop.f32.mrb[0].mxu0
        %v2741 = vadd.f32 %v2501, %v2740
        %v2742 = vpop.f32.mrb[0].mxu0
        %2743 = vmatprep.mubr.bf16.mxu0 %v2461
        %2744 = vmatmul.mubr.bf16.gmra.mrb[0].mxu0 %v2460
        %v2745 = vpop.f32.mrb[0].mxu0
        %v2746 = vadd.f32 %v2501, %v2745
        %v2747 = vpop.f32.mrb[0].mxu0
        %v2748 = vpop.f32.mrb[0].mxu0
        %v2749 = vadd.f32 %v2501, %v2748
        %v2750 = vpop.f32.mrb[0].mxu0
        %2751 = vmatprep.mubr.bf16.mxu0 %v2463
        %2752 = vmatmul.mubr.bf16.gmra.mrb[0].mxu0 %v2462
        %v2753 = vpop.f32.mrb[0].mxu0
        %v2754 = vadd.f32 %v2501, %v2753
        %v2755 = vpop.f32.mrb[0].mxu0
        %v2756 = vpop.f32.mrb[0].mxu0
        %v2757 = vadd.f32 %v2501, %v2756
        %v2758 = vpop.f32.mrb[0].mxu0
        %2759 = vdwg.mxu0
        %v2760 = vpack.c.bf16 %v2637, %v2634
        %v2761 = vpack.c.bf16 %v2645, %v2642
        %v2762 = vpack.c.bf16 %v2653, %v2650
        %v2763 = vpack.c.bf16 %v2661, %v2658
        %v2764 = vpack.c.bf16 %v2669, %v2666
        %v2765 = vpack.c.bf16 %v2677, %v2674
        %v2766 = vpack.c.bf16 %v2685, %v2682
        %v2767 = vpack.c.bf16 %v2693, %v2690
        %v2768 = vpack.c.bf16 %v2701, %v2698
        %v2769 = vpack.c.bf16 %v2709, %v2706
        %v2770 = vpack.c.bf16 %v2717, %v2714
        %v2771 = vpack.c.bf16 %v2725, %v2722
        %v2772 = vpack.c.bf16 %v2733, %v2730
        %v2773 = vpack.c.bf16 %v2741, %v2738
        %v2774 = vpack.c.bf16 %v2749, %v2746
        %v2775 = vpack.c.bf16 %v2757, %v2754
        %v2792 = vunpack.c.l.b16 %v2760
        %v2793 = vunpack.c.h.b16 %v2760
        %v2794 = vunpack.c.l.b16 %v2761
        %v2795 = vunpack.c.h.b16 %v2761
        %v2796 = vunpack.c.l.b16 %v2762
        %v2797 = vunpack.c.h.b16 %v2762
        %v2798 = vunpack.c.l.b16 %v2763
        %v2799 = vunpack.c.h.b16 %v2763
        %v2800 = vunpack.c.l.b16 %v2764
        %v2801 = vunpack.c.h.b16 %v2764
        %v2802 = vunpack.c.l.b16 %v2765
        %v2803 = vunpack.c.h.b16 %v2765
        %v2804 = vunpack.c.l.b16 %v2766
        %v2805 = vunpack.c.h.b16 %v2766
        %v2806 = vunpack.c.l.b16 %v2767
        %v2807 = vunpack.c.h.b16 %v2767
        %v2808 = vunpack.c.l.b16 %v2768
        %v2809 = vunpack.c.h.b16 %v2768
        %v2810 = vunpack.c.l.b16 %v2769
        %v2811 = vunpack.c.h.b16 %v2769
        %v2812 = vunpack.c.l.b16 %v2770
        %v2813 = vunpack.c.h.b16 %v2770
        %v2814 = vunpack.c.l.b16 %v2771
        %v2815 = vunpack.c.h.b16 %v2771
        %v2816 = vunpack.c.l.b16 %v2772
        %v2817 = vunpack.c.h.b16 %v2772
        %v2818 = vunpack.c.l.b16 %v2773
        %v2819 = vunpack.c.h.b16 %v2773
        %v2820 = vunpack.c.l.b16 %v2774
        %v2821 = vunpack.c.h.b16 %v2774
        %v2822 = vunpack.c.l.b16 %v2775
        %v2823 = vunpack.c.h.b16 %v2775
        %v2824 = vpack.c.b16 %v2792, %v2792
        %v2825 = vpack.c.b16 %v2793, %v2793
        %v2826 = vpack.c.b16 %v2794, %v2794
        %v2827 = vpack.c.b16 %v2795, %v2795
        %v2828 = vpack.c.b16 %v2796, %v2796
        %v2829 = vpack.c.b16 %v2797, %v2797
        %v2830 = vpack.c.b16 %v2798, %v2798
        %v2831 = vpack.c.b16 %v2799, %v2799
        %v2832 = vpack.c.b16 %v2800, %v2800
        %v2833 = vpack.c.b16 %v2801, %v2801
        %v2834 = vpack.c.b16 %v2802, %v2802
        %v2835 = vpack.c.b16 %v2803, %v2803
        %v2836 = vpack.c.b16 %v2804, %v2804
        %v2837 = vpack.c.b16 %v2805, %v2805
        %v2838 = vpack.c.b16 %v2806, %v2806
        %v2839 = vpack.c.b16 %v2807, %v2807
        %v2840 = vpack.c.b16 %v2808, %v2808
        %v2841 = vpack.c.b16 %v2809, %v2809
        %v2842 = vpack.c.b16 %v2810, %v2810
        %v2843 = vpack.c.b16 %v2811, %v2811
        %v2844 = vpack.c.b16 %v2812, %v2812
        %v2845 = vpack.c.b16 %v2813, %v2813
        %v2846 = vpack.c.b16 %v2814, %v2814
        %v2847 = vpack.c.b16 %v2815, %v2815
        %v2848 = vpack.c.b16 %v2816, %v2816
        %v2849 = vpack.c.b16 %v2817, %v2817
        %v2850 = vpack.c.b16 %v2818, %v2818
        %v2851 = vpack.c.b16 %v2819, %v2819
        %v2852 = vpack.c.b16 %v2820, %v2820
        %v2853 = vpack.c.b16 %v2821, %v2821
        %v2854 = vpack.c.b16 %v2822, %v2822
        %v2855 = vpack.c.b16 %v2823, %v2823
        %2888 = vst [vmem:[%s271] sm:$0xf] %v2824
        %2889 = vst [vmem:[%s271 + $0x4] sm:$0xf] %v2825
        %2890 = vst [vmem:[%s271 + $0x8] sm:$0xf] %v2826
        %2891 = vst [vmem:[%s271 + $0xc] sm:$0xf] %v2827
        %2892 = vst [vmem:[%s271 + $0x10] sm:$0xf] %v2828
        %2893 = vst [vmem:[%s271 + $0x14] sm:$0xf] %v2829
        %2894 = vst [vmem:[%s271 + $0x18] sm:$0xf] %v2830
        %2895 = vst [vmem:[%s271 + $0x1c] sm:$0xf] %v2831
        %2896 = vst [vmem:[%s271 + $0x20] sm:$0xf] %v2832
        %2897 = vst [vmem:[%s271 + $0x24] sm:$0xf] %v2833
        %2898 = vst [vmem:[%s271 + $0x28] sm:$0xf] %v2834
        %2899 = vst [vmem:[%s271 + $0x2c] sm:$0xf] %v2835
        %2900 = vst [vmem:[%s271 + $0x30] sm:$0xf] %v2836
        %2901 = vst [vmem:[%s271 + $0x34] sm:$0xf] %v2837
        %2902 = vst [vmem:[%s271 + $0x38] sm:$0xf] %v2838
        %2903 = vst [vmem:[%s271 + $0x3c] sm:$0xf] %v2839
        %2904 = vst [vmem:[%s271 + $0x40] sm:$0xf] %v2840
        %2905 = vst [vmem:[%s271 + $0x44] sm:$0xf] %v2841
        %2906 = vst [vmem:[%s271 + $0x48] sm:$0xf] %v2842
        %2907 = vst [vmem:[%s271 + $0x4c] sm:$0xf] %v2843
        %2908 = vst [vmem:[%s271 + $0x50] sm:$0xf] %v2844
        %2909 = vst [vmem:[%s271 + $0x54] sm:$0xf] %v2845
        %2910 = vst [vmem:[%s271 + $0x58] sm:$0xf] %v2846
        %2911 = vst [vmem:[%s271 + $0x5c] sm:$0xf] %v2847
        %2912 = vst [vmem:[%s271 + $0x60] sm:$0xf] %v2848
        %2913 = vst [vmem:[%s271 + $0x64] sm:$0xf] %v2849
        %2914 = vst [vmem:[%s271 + $0x68] sm:$0xf] %v2850
        %2915 = vst [vmem:[%s271 + $0x6c] sm:$0xf] %v2851
        %2916 = vst [vmem:[%s271 + $0x70] sm:$0xf] %v2852
        %2917 = vst [vmem:[%s271 + $0x74] sm:$0xf] %v2853
        %2918 = vst [vmem:[%s271 + $0x78] sm:$0xf] %v2854
        %2919 = vst [vmem:[%s271 + $0x7c] sm:$0xf] %v2855
        %s2920 = sand.u32 %s141, 1
        %s2921 = scalar_lea.sflag [#allocation4], %s2920
        %s2922 = sand.u32 %s141, 1
        %s2923 = smul.addr %s2922, 128
        %s2924 = scalar_lea.vmem [#allocation8], %s2923
        // Predicated region
        $region53: #{tpu_custom_call.1} parent=39 // pred_check
          %p2925 = pneg %p151
        $region54: #{tpu_custom_call.1} parent=39 // pred_check_branch
          %2927 = sbr.rel (%p2925) target = $region56
        $region55: #{tpu_custom_call.1} parent=39 // pred_region
          %s2928 = smul.u32 32, %s23
          %s2930 = ssub.s32 2048, 2048
          %2931 = vsyncadd %s2921, %s2930
          %s2932 = smul.addr %s2928, 64
          %s2933 = scalar_lea.hbm %s5, %s2932
          %s2934 = sshll.u32 %s2924, 4
          %s2935 = int_to_ptr.vmem [resolvable:$true] %s2934
          %2940 = dma.vmem_to_hbm [thread:$0]  %s2935, 2048, %s2933, %s2921, 64, 64, 4
        $region56: #{tpu_custom_call.1} parent=39 // pred_fallthru
          _
      $region40: #{tpu_custom_call.1} parent=5 // pred_fallthru
        _
      %p2941 = scmp.le.s32.totalorder 2, %s18
      // Predicated region
      $region57: #{tpu_custom_call.1} parent=5 // pred_check
        %p2942 = pneg %p2941
      $region58: #{tpu_custom_call.1} parent=5 // pred_check_branch
        %2944 = sbr.rel (%p2942) target = $region60
      $region59: #{tpu_custom_call.1} parent=5 // pred_region
        %s2945 = ssub.s32 %s18, 2
        // Predicated region
        $region61: #{tpu_custom_call.1} parent=59 // pred_check
          %p2946 = pneg %p157
        $region62: #{tpu_custom_call.1} parent=59 // pred_check_branch
          %2948 = sbr.rel (%p2946) target = $region64
        $region63: #{tpu_custom_call.1} parent=59 // pred_region
          %s2949 = sand.u32 %s142, 1
          %s2950 = scalar_lea.sflag [#allocation4], %s2949
          %s2951 = sand.u32 %s142, 1
          %s2952 = smul.addr %s2951, 128
          %s2953 = scalar_lea.vmem [#allocation8], %s2952
          %2954 = dma.done %s2950, 2048
        $region64: #{tpu_custom_call.1} parent=59 // pred_fallthru
          _
      $region60: #{tpu_custom_call.1} parent=5 // pred_fallthru
        _
    $region6: #{tpu_custom_call.1} parent=1 // loop_footer
      %s22 = sadd.s32 1, %s18
    $region7: #{tpu_custom_call.1} parent=1 // loop_footer_branch
      %17 = sbr.rel target = $region3
    $region8: #{tpu_custom_call.1} parent=1 // loop_exit
      _
    %2955 = vsyncpa [#allocation3], 1
    %s2956 = scalar_lea.sflag [#allocation3], 1
    %2957 = vsyncpa %s2956, 1
    %2958 = vsyncpa [#allocation6], 1
    %2959 = vsyncpa [#allocation4], 1
    %s2960 = scalar_lea.sflag [#allocation4], 1
    %2961 = vsyncpa %s2960, 1

</llo_original>
